<compile_context>
chip_gen: v7x
topology: tpu7x:2x2x1
jax: 0.10.0
libtpu: 0.0.40
codegen_flags: <defaults>
</compile_context>

<pallas_src>
import math
import functools

import jax
import jax.numpy as jnp
from jax.experimental import pallas as pl
from jax.experimental.pallas import tpu as pltpu

_MASK_VALUE = -1e20


# ----------------------------------------------------------------------------
# Helpers
# ----------------------------------------------------------------------------
def _pick_block(dim, max_block, align=8):
    """Largest divisor of `dim` that is <= max_block and a multiple of
    `align`, falling back to the full dim (always tiling-legal)."""
    if dim <= max_block:
        return dim
    start = (max_block // align) * align
    for b in range(start, align - 1, -align):
        if dim % b == 0:
            return b
    return dim


def _physical_vmem_bytes():
    try:
        return int(pltpu.get_tpu_info().vmem_capacity_bytes)
    except Exception:
        return 64 << 20          # be conservative (v7x physical VMEM)


def _vmem_limit(working_set_bytes, headroom=16 << 20):
    """Per-generation scoped-VMEM budget: working set + headroom, capped at
    75% of physical VMEM (v5e/v6e -> ~96 MiB, v7x -> 48 MiB)."""
    phys = _physical_vmem_bytes()
    cap = (phys // 4) * 3
    floor = min(32 << 20, cap)
    want = int(working_set_bytes) + headroom
    return int(max(min(want, cap), floor))


# ----------------------------------------------------------------------------
# Kernel A: flash-style attention forward (online softmax over KV blocks).
#   grid = (N, H, num_q, num_k), ki innermost (reduction axis).
#   Outputs: per-head attention output (written into (N,S,E)) and lse.
# ----------------------------------------------------------------------------
def _flash_attn_kernel(*refs, scale, block_q, block_k, causal, has_mask,
                       compute_dtype):
    if has_mask:
        q_ref, k_ref, v_ref, mask_ref, out_ref, lse_ref, m_ref, l_ref, acc_ref = refs
    else:
        q_ref, k_ref, v_ref, out_ref, lse_ref, m_ref, l_ref, acc_ref = refs
        mask_ref = None

    qi = pl.program_id(2)
    ki = pl.program_id(3)

    @pl.when(ki == 0)
    def _init():
        m_ref[...] = jnp.full_like(m_ref, -jnp.inf)
        l_ref[...] = jnp.zeros_like(l_ref)
        acc_ref[...] = jnp.zeros_like(acc_ref)

    def _compute():
        # Fold 1/sqrt(Dh) into q (TQ x Dh multiply instead of TQ x TK).
        q = (q_ref[...].astype(jnp.float32) * scale).astype(compute_dtype)
        k = k_ref[...].astype(compute_dtype)
        s = jax.lax.dot_general(q, k, (((1,), (1,)), ((), ())),
                                preferred_element_type=jnp.float32)  # (TQ,TK)
        valid = None
        if causal:
            row = qi * block_q + jax.lax.broadcasted_iota(jnp.int32, s.shape, 0)
            col = ki * block_k + jax.lax.broadcasted_iota(jnp.int32, s.shape, 1)
            s = jnp.where(col <= row, s, _MASK_VALUE)
        elif has_mask:
            valid = mask_ref[...] != 0
            s = jnp.where(valid, s, _MASK_VALUE)

        m_prev = m_ref[...]
        m_new = jnp.maximum(m_prev, jnp.max(s, axis=-1, keepdims=True))
        p = jnp.exp(s - m_new)
        if (not causal) and has_mask:
            # Guard rows that are fully masked inside this block.
            p = jnp.where(valid, p, 0.0)
        alpha = jnp.exp(m_prev - m_new)
        l_ref[...] = alpha * l_ref[...] + jnp.sum(p, axis=-1, keepdims=True)
        acc_ref[...] = alpha * acc_ref[...] + jnp.dot(
            p.astype(compute_dtype), v_ref[...].astype(compute_dtype),
            preferred_element_type=jnp.float32)
        m_ref[...] = m_new

    if causal:
        # Skip KV blocks entirely above the causal diagonal (~2x less work).
        pl.when(ki * block_k <= (qi + 1) * block_q - 1)(_compute)
    else:
        _compute()

    @pl.when(ki == pl.num_programs(3) - 1)
    def _finalize():
        l = l_ref[...]
        out_ref[...] = (acc_ref[...] * pl.reciprocal(l, approx=True)
                        ).astype(out_ref.dtype)
        lse_ref[...] = m_ref[...] + jnp.log(l)


# ----------------------------------------------------------------------------
# Kernel B: attention weights (only when the caller wants them returned).
#   attn = exp(scale*q@k^T - lse) -- exact normalization via the flash lse.
#   Fully-masked causal blocks are written as zeros without any compute.
# ----------------------------------------------------------------------------
def _attn_weights_kernel(*refs, scale, block_q, block_k, causal, has_mask,
                         compute_dtype):
    if has_mask:
        q_ref, k_ref, lse_ref, mask_ref, attn_ref = refs
    else:
        q_ref, k_ref, lse_ref, attn_ref = refs
        mask_ref = None

    qi = pl.program_id(2)
    ki = pl.program_id(3)

    def _compute():
        q = (q_ref[...].astype(jnp.float32) * scale).astype(compute_dtype)
        k = k_ref[...].astype(compute_dtype)
        s = jax.lax.dot_general(q, k, (((1,), (1,)), ((), ())),
                                preferred_element_type=jnp.float32)
        if causal:
            row = qi * block_q + jax.lax.broadcasted_iota(jnp.int32, s.shape, 0)
            col = ki * block_k + jax.lax.broadcasted_iota(jnp.int32, s.shape, 1)
            s = jnp.where(col <= row, s, _MASK_VALUE)
        elif has_mask:
            s = jnp.where(mask_ref[...] != 0, s, _MASK_VALUE)
        attn_ref[...] = jnp.exp(s - lse_ref[...]).astype(attn_ref.dtype)

    if causal:
        skip = ki * block_k > (qi + 1) * block_q - 1

        @pl.when(skip)
        def _zeros():
            attn_ref[...] = jnp.zeros_like(attn_ref)

        pl.when(jnp.logical_not(skip))(_compute)
    else:
        _compute()


# ----------------------------------------------------------------------------
# Fallback kernel for lane-unaligned / tiny head_dim: keeps the (N, S, E)
# layout and slices heads in-kernel (lane-dense loads/stores, no HBM
# head-split transposes).  One batch element per grid step.
# ----------------------------------------------------------------------------
# TODO(synk): this path holds full (S, E) K/V blocks per step; lane-unaligned
# head_dim with very long S would need a head-grouped flash variant.
def _small_attn_kernel(*refs, scale, heads, head_dim, mask_mode, compute_dtype):
    if mask_mode == "full":
        q_ref, k_ref, v_ref, mask_ref, out_ref, attn_ref = refs
    else:
        q_ref, k_ref, v_ref, out_ref, attn_ref = refs
        mask_ref = None

    q = q_ref[...].astype(jnp.float32) * scale      # (S, E)
    k = k_ref[...].astype(jnp.float32)
    v = v_ref[...].astype(jnp.float32)
    seq = q.shape[0]

    if mask_mode == "full":
        valid = mask_ref[...] != 0
    elif mask_mode == "causal":
        row = jax.lax.broadcasted_iota(jnp.int32, (seq, seq), 0)
        col = jax.lax.broadcasted_iota(jnp.int32, (seq, seq), 1)
        valid = col <= row
    else:
        valid = None

    outs = []
    for h in range(heads):                           # static, unrolled
        lo, hi = h * head_dim, (h + 1) * head_dim
        qh = q[:, lo:hi].astype(compute_dtype)
        kh = k[:, lo:hi].astype(compute_dtype)
        vh = v[:, lo:hi].astype(compute_dtype)
        s = jax.lax.dot_general(qh, kh, (((1,), (1,)), ((), ())),
                                preferred_element_type=jnp.float32)
        if valid is not None:
            s = jnp.where(valid, s, _MASK_VALUE)
        m = jnp.max(s, axis=-1, keepdims=True)
        e = jnp.exp(s - m)
        attn = e / jnp.sum(e, axis=-1, keepdims=True)
        attn_ref[h, :, :] = attn.astype(attn_ref.dtype)
        outs.append(jnp.dot(attn.astype(compute_dtype), vh,
                            preferred_element_type=jnp.float32))
    out_ref[...] = jnp.concatenate(outs, axis=-1).astype(out_ref.dtype)


# ----------------------------------------------------------------------------
# fc_out kernel: y = x @ Wt + b, with Wt = fc_w.T transposed once on the host.
# ----------------------------------------------------------------------------
def _fc_kernel(x_ref, w_ref, b_ref, o_ref, *, compute_dtype):
    x = x_ref[...].astype(compute_dtype)            # (TM, E)
    w = w_ref[...].astype(compute_dtype)            # (E, E), (in, out) layout
    y = jnp.dot(x, w, preferred_element_type=jnp.float32)
    o_ref[...] = (y + b_ref[...].astype(jnp.float32)).astype(o_ref.dtype)


# ----------------------------------------------------------------------------
# Wrapper
# ----------------------------------------------------------------------------
def self_attention_forward(values, keys, query, mask, fc_w, fc_b, *, heads,
                           is_causal=True, return_attention=True,
                           q_block=256, kv_block=512, fc_row_block=256,
                           compute_dtype=jnp.float32, attn_dtype=jnp.float32):
    """Forward pass of SelfAttention.

    values/keys/query: (N, S, E); mask: (1, 1, S, S) or None; fc_w: (E, E)
    torch Linear weight (out, in); fc_b: (E,).
    is_causal=True declares the provided mask to be the standard causal mask
    (enabling in-kernel iota masking + block skipping); pass is_causal=False
    to have an arbitrary mask applied from its actual values.
    Returns (out (N, S, E), attention (N, heads, S, S) or None).
    """
    N, S, E = query.shape
    H = heads
    Dh = E // H
    assert Dh * H == E, "embed_size must be divisible by heads"

    out_dtype = query.dtype
    use_bf16 = jnp.dtype(compute_dtype) == jnp.dtype(jnp.bfloat16)
    head_out_dtype = jnp.bfloat16 if use_bf16 else out_dtype

    if mask is None:
        mask_mode = "none"
        mask2d = None
    elif is_causal:
        mask_mode = "causal"          # iota-generated in-kernel, mask not read
        mask2d = None
    else:
        mask_mode = "full"
        mask2d = jnp.reshape(mask, (S, S)).astype(jnp.float32)

    scale = 1.0 / math.sqrt(Dh)
    q_align = 16 if use_bf16 else 8
    attention = None

    lane_aligned = (Dh % 128 == 0) and (S % 8 == 0)
    if lane_aligned:
        # ------------------ flash path (KV-tiled, online softmax) ----------
        TQ = _pick_block(S, q_block, align=q_align)
        TK = _pick_block(S, kv_block, align=128)     # lane dim of attn blocks
        num_q, num_k = S // TQ, S // TK
        grid = (N, H, num_q, num_k)
        causal = mask_mode == "causal"
        has_mask = mask_mode == "full"

        def q_map(n, h, qi, ki):
            return (n, qi, h)

        if causal:
            def kv_map(n, h, qi, ki):
                # Clamp so skipped (fully masked) blocks issue no extra DMA.
                return (n, jnp.minimum(ki, ((qi + 1) * TQ - 1) // TK), h)
        else:
            def kv_map(n, h, qi, ki):
                return (n, ki, h)

        def lse_map(n, h, qi, ki):
            return (n, h, qi, 0)

        in_specs = [pl.BlockSpec((None, TQ, Dh), q_map),
                    pl.BlockSpec((None, TK, Dh), kv_map),
                    pl.BlockSpec((None, TK, Dh), kv_map)]
        flash_inputs = [query, keys, values]
        if has_mask:
            in_specs.append(pl.BlockSpec((TQ, TK),
                                         lambda n, h, qi, ki: (qi, ki)))
            flash_inputs.append(mask2d)

        flash_ws = 4 * (4 * TQ * Dh + 4 * TK * Dh + 8 * TQ * TK + 8 * TQ)
        out_heads, lse = pl.pallas_call(
            functools.partial(_flash_attn_kernel, scale=scale, block_q=TQ,
                              block_k=TK, causal=causal, has_mask=has_mask,
                              compute_dtype=compute_dtype),
            out_shape=(jax.ShapeDtypeStruct((N, S, E), head_out_dtype),
                       jax.ShapeDtypeStruct((N, H, S, 1), jnp.float32)),
            grid=grid,
            in_specs=in_specs,
            out_specs=(pl.BlockSpec((None, TQ, Dh), q_map),
                       pl.BlockSpec((None, None, TQ, 1), lse_map)),
            scratch_shapes=[pltpu.VMEM((TQ, 1), jnp.float32),
                            pltpu.VMEM((TQ, 1), jnp.float32),
                            pltpu.VMEM((TQ, Dh), jnp.float32)],
            compiler_params=pltpu.CompilerParams(
                # qi kept "arbitrary" so megacore splits on N/H and does not
                # duplicate K/V DMA across TensorCores.
                dimension_semantics=("parallel", "parallel",
                                     "arbitrary", "arbitrary"),
                vmem_limit_bytes=_vmem_limit(flash_ws)),
        )(*flash_inputs)

        if return_attention:
            attn_in_specs = [pl.BlockSpec((None, TQ, Dh), q_map),
                             pl.BlockSpec((None, TK, Dh), kv_map),
                             pl.BlockSpec((None, None, TQ, 1), lse_map)]
            attn_inputs = [query, keys, lse]
            if has_mask:
                attn_in_specs.append(pl.BlockSpec((TQ, TK),
                                                  lambda n, h, qi, ki: (qi, ki)))
                attn_inputs.append(mask2d)
            attnk_ws = 4 * (2 * TQ * Dh + 2 * TK * Dh + 6 * TQ * TK + 2 * TQ)
            attention = pl.pallas_call(
                functools.partial(_attn_weights_kernel, scale=scale,
                                  block_q=TQ, block_k=TK, causal=causal,
                                  has_mask=has_mask,
                                  compute_dtype=compute_dtype),
                out_shape=jax.ShapeDtypeStruct((N, H, S, S), attn_dtype),
                grid=grid,
                in_specs=attn_in_specs,
                out_specs=pl.BlockSpec((None, None, TQ, TK),
                                       lambda n, h, qi, ki: (n, h, qi, ki)),
                compiler_params=pltpu.CompilerParams(
                    dimension_semantics=("parallel",) * 4,
                    vmem_limit_bytes=_vmem_limit(attnk_ws)),
            )(*attn_inputs)
    else:
        # ------------- fallback: tiny / lane-unaligned head_dim ------------
        in_specs = [pl.BlockSpec((None, S, E), lambda n: (n, 0, 0))] * 3
        inputs = [query, keys, values]
        if mask_mode == "full":
            in_specs.append(pl.BlockSpec((S, S), lambda n: (0, 0)))
            inputs.append(mask2d)
        small_ws = 4 * (8 * S * E + (H + 4) * S * S)
        out_heads, attention = pl.pallas_call(
            functools.partial(_small_attn_kernel, scale=scale, heads=H,
                              head_dim=Dh, mask_mode=mask_mode,
                              compute_dtype=compute_dtype),
            out_shape=(jax.ShapeDtypeStruct((N, S, E), head_out_dtype),
                       jax.ShapeDtypeStruct((N, H, S, S), attn_dtype)),
            grid=(N,),
            in_specs=in_specs,
            out_specs=(pl.BlockSpec((None, S, E), lambda n: (n, 0, 0)),
                       pl.BlockSpec((None, H, S, S), lambda n: (n, 0, 0, 0))),
            compiler_params=pltpu.CompilerParams(
                dimension_semantics=("parallel",),
                vmem_limit_bytes=_vmem_limit(small_ws)),
        )(*inputs)
        if not return_attention:
            attention = None

    # ---- fc_out: y = concat_heads @ fc_w.T + b, tiled over rows ----
    R = N * S
    concat = out_heads.reshape(R, E)
    TM = _pick_block(R, fc_row_block, align=q_align)

    w_t = fc_w.T                                   # one-time XLA transpose
    if use_bf16:
        w_t = w_t.astype(jnp.bfloat16)             # halves resident weight
    w_bytes = E * E * w_t.dtype.itemsize
    if w_bytes >= (8 << 20):
        # Large resident weight: keep a single buffer (constant index map, no
        # double buffering) to stay inside v7x's 64 MiB VMEM.
        w_spec = pl.BlockSpec((E, E), lambda i: (0, 0),
                              pipeline_mode=pl.Buffered(1))
    else:
        w_spec = pl.BlockSpec((E, E), lambda i: (0, 0))

    fc_ws = 4 * (4 * TM * E + 2 * E) + 2 * w_bytes
    out = pl.pallas_call(
        functools.partial(_fc_kernel, compute_dtype=compute_dtype),
        out_shape=jax.ShapeDtypeStruct((R, E), out_dtype),
        grid=(R // TM,),
        in_specs=[pl.BlockSpec((TM, E), lambda i: (i, 0)),
                  w_spec,
                  pl.BlockSpec((1, E), lambda i: (0, 0))],
        out_specs=pl.BlockSpec((TM, E), lambda i: (i, 0)),
        compiler_params=pltpu.CompilerParams(
            dimension_semantics=("parallel",),
            vmem_limit_bytes=_vmem_limit(fc_ws)),
    )(concat, w_t, fc_b.reshape(1, E))

    return out.reshape(N, S, E), attention


# ----------------------------------------------------------------------------
# Pure-JAX reference (mirrors the PyTorch forward) for correctness checks.
# ----------------------------------------------------------------------------
def _reference(values, keys, query, mask, fc_w, fc_b, heads):
    N, S, E = query.shape
    H, Dh = heads, E // heads
    q = query.reshape(N, S, H, Dh).transpose(0, 2, 1, 3)
    k = keys.reshape(N, S, H, Dh).transpose(0, 2, 1, 3)
    v = values.reshape(N, S, H, Dh).transpose(0, 2, 1, 3)
    energy = jnp.einsum("nhqd,nhkd->nhqk", q, k)
    if mask is not None:
        energy = jnp.where(mask == 0, jnp.float32(-1e20), energy)
    attn = jax.nn.softmax(energy / math.sqrt(Dh), axis=-1)
    out = jnp.einsum("nhqk,nhkd->nhqd", attn, v)
    out = out.transpose(0, 2, 1, 3).reshape(N, S, E)
    out = out @ fc_w.T + fc_b
    return out, attn


def _run_case(key, N, S, E, H, label, mask_kind="causal",
              compute_dtype=jnp.float32, out_tol=5e-2, attn_tol=2e-2, **kw):
    k1, k2, k3, k4, k5, k6 = jax.random.split(key, 6)
    query = jax.random.normal(k1, (N, S, E), dtype=jnp.float32)
    keys_in = jax.random.normal(k2, (N, S, E), dtype=jnp.float32)
    values_in = jax.random.normal(k3, (N, S, E), dtype=jnp.float32)
    bound = 1.0 / math.sqrt(E)
    fc_w = jax.random.uniform(k4, (E, E), minval=-bound, maxval=bound,
                              dtype=jnp.float32)
    fc_b = jax.random.uniform(k5, (E,), minval=-bound, maxval=bound,
                              dtype=jnp.float32)

    if mask_kind == "causal":
        mask = jnp.tril(jnp.ones((S, S), jnp.float32)).reshape(1, 1, S, S)
        is_causal = True
    elif mask_kind == "causal_as_data":
        mask = jnp.tril(jnp.ones((S, S), jnp.float32)).reshape(1, 1, S, S)
        is_causal = False
    else:  # "random" non-causal mask (diagonal kept so no row is empty)
        bern = (jax.random.uniform(k6, (S, S)) > 0.5).astype(jnp.float32)
        mask = jnp.maximum(bern, jnp.eye(S, dtype=jnp.float32)
                           ).reshape(1, 1, S, S)
        is_causal = False

    out, attention = self_attention_forward(
        values_in, keys_in, query, mask, fc_w, fc_b, heads=H,
        is_causal=is_causal, compute_dtype=compute_dtype, **kw)
    out = jax.block_until_ready(out)
    attention = jax.block_until_ready(attention)

    ref_out, ref_attn = _reference(values_in, keys_in, query, mask,
                                   fc_w, fc_b, H)

    assert out.shape == (N, S, E)
    assert attention.shape == (N, H, S, S)
    attn_f32 = attention.astype(jnp.float32)
    err_o = float(jnp.max(jnp.abs(out - ref_out)))
    err_a = float(jnp.max(jnp.abs(attn_f32 - ref_attn)))
    assert jnp.allclose(out, ref_out, atol=out_tol, rtol=out_tol), (
        f"{label}: out mismatch, max abs err {err_o}")
    assert jnp.allclose(attn_f32, ref_attn, atol=attn_tol, rtol=attn_tol), (
        f"{label}: attention mismatch, max abs err {err_a}")


if __name__ == "__main__":
    root = jax.random.PRNGKey(0)
    ks = jax.random.split(root, 5)

    # Toy shape from the module (head_dim=8 -> in-kernel head-slicing fallback).
    _run_case(ks[0], N=2, S=8, E=32, H=4, label="small-causal",
              mask_kind="causal")
    # Arbitrary (non-causal) mask applied from its values.
    _run_case(ks[1], N=2, S=8, E=32, H=4, label="small-random-mask",
              mask_kind="random")

    # Lane-aligned (head_dim=128): flash path, multiple q/kv blocks,
    # causal block skipping + clamped KV index maps exercised.
    _run_case(ks[2], N=2, S=256, E=512, H=4, label="flash-causal-f32",
              mask_kind="causal", q_block=128, kv_block=128)
    # Same mask fed as data tiles (non-causal path through the flash kernels).
    _run_case(ks[3], N=2, S=256, E=512, H=4, label="flash-mask-f32",
              mask_kind="causal_as_data", q_block=128, kv_block=128)
    # bf16 MXU inputs (f32 accumulation) -- the recommended v6e/v7x config.
    _run_case(ks[4], N=2, S=256, E=512, H=4, label="flash-causal-bf16",
              mask_kind="causal", compute_dtype=jnp.bfloat16,
              q_block=128, kv_block=128, out_tol=1e-1, attn_tol=5e-2)

    print("KERNEL_OK")
</pallas_src>

<mosaic_0001>
module attributes {stable_mosaic.version = 11 : i64} {
  func.func @_small_attn_kernel(%arg0: i32, %arg1: memref<1x8x32xf32, #tpu.memory_space<vmem>>, %arg2: memref<1x8x32xf32, #tpu.memory_space<vmem>>, %arg3: memref<1x8x32xf32, #tpu.memory_space<vmem>>, %arg4: memref<1x8x32xf32, #tpu.memory_space<vmem>>, %arg5: memref<1x4x8x8xf32, #tpu.memory_space<vmem>>) attributes {dimension_semantics = [#tpu.dimension_semantics<parallel>], iteration_bounds = array<i64: 2>, scalar_prefetch = 0 : i64, scratch_operands = 0 : i64, tpu.core_type = #tpu.core_type<tc>, window_params = [{transform_indices = @transform_0, window_bounds = array<i64: 1, 8, 32>}, {transform_indices = @transform_1, window_bounds = array<i64: 1, 8, 32>}, {transform_indices = @transform_2, window_bounds = array<i64: 1, 8, 32>}, {transform_indices = @transform_3, window_bounds = array<i64: 1, 8, 32>}, {transform_indices = @transform_4, window_bounds = array<i64: 1, 4, 8, 8>}]} {
    %c0 = arith.constant 0 : index
    %c0_0 = arith.constant 0 : index
    %c0_1 = arith.constant 0 : index
    %0 = vector.load %arg1[%c0, %c0_0, %c0_1] : memref<1x8x32xf32, #tpu.memory_space<vmem>>, vector<1x8x32xf32>
    %1 = vector.shape_cast %0 : vector<1x8x32xf32> to vector<8x32xf32>
    %cst = arith.constant 0.353553385 : f32
    %2 = vector.broadcast %cst : f32 to vector<8x32xf32>
    %3 = arith.mulf %1, %2 : vector<8x32xf32>
    %c0_2 = arith.constant 0 : index
    %c0_3 = arith.constant 0 : index
    %c0_4 = arith.constant 0 : index
    %4 = vector.load %arg2[%c0_2, %c0_3, %c0_4] : memref<1x8x32xf32, #tpu.memory_space<vmem>>, vector<1x8x32xf32>
    %5 = vector.shape_cast %4 : vector<1x8x32xf32> to vector<8x32xf32>
    %c0_5 = arith.constant 0 : index
    %c0_6 = arith.constant 0 : index
    %c0_7 = arith.constant 0 : index
    %6 = vector.load %arg3[%c0_5, %c0_6, %c0_7] : memref<1x8x32xf32, #tpu.memory_space<vmem>>, vector<1x8x32xf32>
    %7 = vector.shape_cast %6 : vector<1x8x32xf32> to vector<8x32xf32>
    %8 = tpu.iota {dimensions = array<i32: 0>} : vector<8x8xi32>
    %9 = tpu.iota {dimensions = array<i32: 1>} : vector<8x8xi32>
    %10 = arith.cmpi sle, %9, %8 : vector<8x8xi32>
    %11 = vector.extract_strided_slice %3 {offsets = [0, 0], sizes = [8, 8], strides = [1, 1]} : vector<8x32xf32> to vector<8x8xf32>
    %12 = vector.extract_strided_slice %5 {offsets = [0, 0], sizes = [8, 8], strides = [1, 1]} : vector<8x32xf32> to vector<8x8xf32>
    %13 = vector.extract_strided_slice %7 {offsets = [0, 0], sizes = [8, 8], strides = [1, 1]} : vector<8x32xf32> to vector<8x8xf32>
    %cst_8 = arith.constant dense<0.000000e+00> : vector<8x8xf32>
    %14 = tpu.matmul %11, %12, %cst_8 {dimension_numbers = #tpu.dot_dimension_numbers<[1], [1], [0], [0], [0, 0, 1, 0], [], []>} : vector<8x8xf32>, vector<8x8xf32>, vector<8x8xf32> -> vector<8x8xf32>
    %cst_9 = arith.constant -1.000000e+20 : f32
    %15 = vector.broadcast %cst_9 : f32 to vector<8x8xf32>
    %16 = arith.select %10, %14, %15 : vector<8x8xi1>, vector<8x8xf32>
    %cst_10 = arith.constant dense<0xFF800000> : vector<8xf32>
    %17 = vector.multi_reduction <maximumf>, %16, %cst_10 [1] : vector<8x8xf32> to vector<8xf32>
    %18 = vector.shape_cast %17 : vector<8xf32> to vector<8x1xf32>
    %19 = vector.broadcast %18 : vector<8x1xf32> to vector<8x8xf32>
    %20 = arith.subf %16, %19 : vector<8x8xf32>
    %21 = math.exp %20 : vector<8x8xf32>
    %cst_11 = arith.constant dense<0.000000e+00> : vector<8xf32>
    %22 = vector.multi_reduction <add>, %21, %cst_11 [1] : vector<8x8xf32> to vector<8xf32>
    %23 = vector.shape_cast %22 : vector<8xf32> to vector<8x1xf32>
    %24 = vector.broadcast %23 : vector<8x1xf32> to vector<8x8xf32>
    %25 = arith.divf %21, %24 : vector<8x8xf32>
    %c0_12 = arith.constant 0 : index
    %c0_13 = arith.constant 0 : index
    %c0_14 = arith.constant 0 : index
    %c0_15 = arith.constant 0 : index
    %26 = vector.load %arg5[%c0_12, %c0_13, %c0_14, %c0_15] : memref<1x4x8x8xf32, #tpu.memory_space<vmem>>, vector<1x1x8x8xf32>
    %27 = vector.shape_cast %26 : vector<1x1x8x8xf32> to vector<8x8xf32>
    %28 = vector.shape_cast %25 : vector<8x8xf32> to vector<1x1x8x8xf32>
    tpu.vector_store %arg5[%c0_12, %c0_13, %c0_14, %c0_15], %28 {strides = array<i32>} : memref<1x4x8x8xf32, #tpu.memory_space<vmem>>, vector<1x1x8x8xf32>,
    %cst_16 = arith.constant dense<0.000000e+00> : vector<8x8xf32>
    %29 = tpu.matmul %25, %13, %cst_16 {dimension_numbers = #tpu.dot_dimension_numbers<[1], [0], [0], [1], [0, 0, 1, 1], [], []>} : vector<8x8xf32>, vector<8x8xf32>, vector<8x8xf32> -> vector<8x8xf32>
    %30 = vector.extract_strided_slice %3 {offsets = [0, 8], sizes = [8, 8], strides = [1, 1]} : vector<8x32xf32> to vector<8x8xf32>
    %31 = vector.extract_strided_slice %5 {offsets = [0, 8], sizes = [8, 8], strides = [1, 1]} : vector<8x32xf32> to vector<8x8xf32>
    %32 = vector.extract_strided_slice %7 {offsets = [0, 8], sizes = [8, 8], strides = [1, 1]} : vector<8x32xf32> to vector<8x8xf32>
    %cst_17 = arith.constant dense<0.000000e+00> : vector<8x8xf32>
    %33 = tpu.matmul %30, %31, %cst_17 {dimension_numbers = #tpu.dot_dimension_numbers<[1], [1], [0], [0], [0, 0, 1, 0], [], []>} : vector<8x8xf32>, vector<8x8xf32>, vector<8x8xf32> -> vector<8x8xf32>
    %cst_18 = arith.constant -1.000000e+20 : f32
    %34 = vector.broadcast %cst_18 : f32 to vector<8x8xf32>
    %35 = arith.select %10, %33, %34 : vector<8x8xi1>, vector<8x8xf32>
    %cst_19 = arith.constant dense<0xFF800000> : vector<8xf32>
    %36 = vector.multi_reduction <maximumf>, %35, %cst_19 [1] : vector<8x8xf32> to vector<8xf32>
    %37 = vector.shape_cast %36 : vector<8xf32> to vector<8x1xf32>
    %38 = vector.broadcast %37 : vector<8x1xf32> to vector<8x8xf32>
    %39 = arith.subf %35, %38 : vector<8x8xf32>
    %40 = math.exp %39 : vector<8x8xf32>
    %cst_20 = arith.constant dense<0.000000e+00> : vector<8xf32>
    %41 = vector.multi_reduction <add>, %40, %cst_20 [1] : vector<8x8xf32> to vector<8xf32>
    %42 = vector.shape_cast %41 : vector<8xf32> to vector<8x1xf32>
    %43 = vector.broadcast %42 : vector<8x1xf32> to vector<8x8xf32>
    %44 = arith.divf %40, %43 : vector<8x8xf32>
    %c0_21 = arith.constant 0 : index
    %c1 = arith.constant 1 : index
    %c0_22 = arith.constant 0 : index
    %c0_23 = arith.constant 0 : index
    %45 = vector.load %arg5[%c0_21, %c1, %c0_22, %c0_23] : memref<1x4x8x8xf32, #tpu.memory_space<vmem>>, vector<1x1x8x8xf32>
    %46 = vector.shape_cast %45 : vector<1x1x8x8xf32> to vector<8x8xf32>
    %47 = vector.shape_cast %44 : vector<8x8xf32> to vector<1x1x8x8xf32>
    tpu.vector_store %arg5[%c0_21, %c1, %c0_22, %c0_23], %47 {strides = array<i32>} : memref<1x4x8x8xf32, #tpu.memory_space<vmem>>, vector<1x1x8x8xf32>,
    %cst_24 = arith.constant dense<0.000000e+00> : vector<8x8xf32>
    %48 = tpu.matmul %44, %32, %cst_24 {dimension_numbers = #tpu.dot_dimension_numbers<[1], [0], [0], [1], [0, 0, 1, 1], [], []>} : vector<8x8xf32>, vector<8x8xf32>, vector<8x8xf32> -> vector<8x8xf32>
    %49 = vector.extract_strided_slice %3 {offsets = [0, 16], sizes = [8, 8], strides = [1, 1]} : vector<8x32xf32> to vector<8x8xf32>
    %50 = vector.extract_strided_slice %5 {offsets = [0, 16], sizes = [8, 8], strides = [1, 1]} : vector<8x32xf32> to vector<8x8xf32>
    %51 = vector.extract_strided_slice %7 {offsets = [0, 16], sizes = [8, 8], strides = [1, 1]} : vector<8x32xf32> to vector<8x8xf32>
    %cst_25 = arith.constant dense<0.000000e+00> : vector<8x8xf32>
    %52 = tpu.matmul %49, %50, %cst_25 {dimension_numbers = #tpu.dot_dimension_numbers<[1], [1], [0], [0], [0, 0, 1, 0], [], []>} : vector<8x8xf32>, vector<8x8xf32>, vector<8x8xf32> -> vector<8x8xf32>
    %cst_26 = arith.constant -1.000000e+20 : f32
    %53 = vector.broadcast %cst_26 : f32 to vector<8x8xf32>
    %54 = arith.select %10, %52, %53 : vector<8x8xi1>, vector<8x8xf32>
    %cst_27 = arith.constant dense<0xFF800000> : vector<8xf32>
    %55 = vector.multi_reduction <maximumf>, %54, %cst_27 [1] : vector<8x8xf32> to vector<8xf32>
    %56 = vector.shape_cast %55 : vector<8xf32> to vector<8x1xf32>
    %57 = vector.broadcast %56 : vector<8x1xf32> to vector<8x8xf32>
    %58 = arith.subf %54, %57 : vector<8x8xf32>
    %59 = math.exp %58 : vector<8x8xf32>
    %cst_28 = arith.constant dense<0.000000e+00> : vector<8xf32>
    %60 = vector.multi_reduction <add>, %59, %cst_28 [1] : vector<8x8xf32> to vector<8xf32>
    %61 = vector.shape_cast %60 : vector<8xf32> to vector<8x1xf32>
    %62 = vector.broadcast %61 : vector<8x1xf32> to vector<8x8xf32>
    %63 = arith.divf %59, %62 : vector<8x8xf32>
    %c0_29 = arith.constant 0 : index
    %c2 = arith.constant 2 : index
    %c0_30 = arith.constant 0 : index
    %c0_31 = arith.constant 0 : index
    %64 = vector.load %arg5[%c0_29, %c2, %c0_30, %c0_31] : memref<1x4x8x8xf32, #tpu.memory_space<vmem>>, vector<1x1x8x8xf32>
    %65 = vector.shape_cast %64 : vector<1x1x8x8xf32> to vector<8x8xf32>
    %66 = vector.shape_cast %63 : vector<8x8xf32> to vector<1x1x8x8xf32>
    tpu.vector_store %arg5[%c0_29, %c2, %c0_30, %c0_31], %66 {strides = array<i32>} : memref<1x4x8x8xf32, #tpu.memory_space<vmem>>, vector<1x1x8x8xf32>,
    %cst_32 = arith.constant dense<0.000000e+00> : vector<8x8xf32>
    %67 = tpu.matmul %63, %51, %cst_32 {dimension_numbers = #tpu.dot_dimension_numbers<[1], [0], [0], [1], [0, 0, 1, 1], [], []>} : vector<8x8xf32>, vector<8x8xf32>, vector<8x8xf32> -> vector<8x8xf32>
    %68 = vector.extract_strided_slice %3 {offsets = [0, 24], sizes = [8, 8], strides = [1, 1]} : vector<8x32xf32> to vector<8x8xf32>
    %69 = vector.extract_strided_slice %5 {offsets = [0, 24], sizes = [8, 8], strides = [1, 1]} : vector<8x32xf32> to vector<8x8xf32>
    %70 = vector.extract_strided_slice %7 {offsets = [0, 24], sizes = [8, 8], strides = [1, 1]} : vector<8x32xf32> to vector<8x8xf32>
    %cst_33 = arith.constant dense<0.000000e+00> : vector<8x8xf32>
    %71 = tpu.matmul %68, %69, %cst_33 {dimension_numbers = #tpu.dot_dimension_numbers<[1], [1], [0], [0], [0, 0, 1, 0], [], []>} : vector<8x8xf32>, vector<8x8xf32>, vector<8x8xf32> -> vector<8x8xf32>
    %cst_34 = arith.constant -1.000000e+20 : f32
    %72 = vector.broadcast %cst_34 : f32 to vector<8x8xf32>
    %73 = arith.select %10, %71, %72 : vector<8x8xi1>, vector<8x8xf32>
    %cst_35 = arith.constant dense<0xFF800000> : vector<8xf32>
    %74 = vector.multi_reduction <maximumf>, %73, %cst_35 [1] : vector<8x8xf32> to vector<8xf32>
    %75 = vector.shape_cast %74 : vector<8xf32> to vector<8x1xf32>
    %76 = vector.broadcast %75 : vector<8x1xf32> to vector<8x8xf32>
    %77 = arith.subf %73, %76 : vector<8x8xf32>
    %78 = math.exp %77 : vector<8x8xf32>
    %cst_36 = arith.constant dense<0.000000e+00> : vector<8xf32>
    %79 = vector.multi_reduction <add>, %78, %cst_36 [1] : vector<8x8xf32> to vector<8xf32>
    %80 = vector.shape_cast %79 : vector<8xf32> to vector<8x1xf32>
    %81 = vector.broadcast %80 : vector<8x1xf32> to vector<8x8xf32>
    %82 = arith.divf %78, %81 : vector<8x8xf32>
    %c0_37 = arith.constant 0 : index
    %c3 = arith.constant 3 : index
    %c0_38 = arith.constant 0 : index
    %c0_39 = arith.constant 0 : index
    %83 = vector.load %arg5[%c0_37, %c3, %c0_38, %c0_39] : memref<1x4x8x8xf32, #tpu.memory_space<vmem>>, vector<1x1x8x8xf32>
    %84 = vector.shape_cast %83 : vector<1x1x8x8xf32> to vector<8x8xf32>
    %85 = vector.shape_cast %82 : vector<8x8xf32> to vector<1x1x8x8xf32>
    tpu.vector_store %arg5[%c0_37, %c3, %c0_38, %c0_39], %85 {strides = array<i32>} : memref<1x4x8x8xf32, #tpu.memory_space<vmem>>, vector<1x1x8x8xf32>,
    %cst_40 = arith.constant dense<0.000000e+00> : vector<8x8xf32>
    %86 = tpu.matmul %82, %70, %cst_40 {dimension_numbers = #tpu.dot_dimension_numbers<[1], [0], [0], [1], [0, 0, 1, 1], [], []>} : vector<8x8xf32>, vector<8x8xf32>, vector<8x8xf32> -> vector<8x8xf32>
    %87 = tpu.concatenate %29, %48, %67, %86 in 1 : vector<8x8xf32>, vector<8x8xf32>, vector<8x8xf32>, vector<8x8xf32> -> vector<8x32xf32>
    %c0_41 = arith.constant 0 : index
    %c0_42 = arith.constant 0 : index
    %c0_43 = arith.constant 0 : index
    %88 = vector.load %arg4[%c0_41, %c0_42, %c0_43] : memref<1x8x32xf32, #tpu.memory_space<vmem>>, vector<1x8x32xf32>
    %89 = vector.shape_cast %88 : vector<1x8x32xf32> to vector<8x32xf32>
    %90 = vector.shape_cast %87 : vector<8x32xf32> to vector<1x8x32xf32>
    tpu.vector_store %arg4[%c0_41, %c0_42, %c0_43], %90 {strides = array<i32>} : memref<1x8x32xf32, #tpu.memory_space<vmem>>, vector<1x8x32xf32>,
    return
  }
  func.func @transform_0(%arg0: i32) -> (i32, i32, i32) {
    %c0_i32 = arith.constant 0 : i32
    %c0_i32_0 = arith.constant 0 : i32
    %c0_i32_1 = arith.constant 0 : i32
    return %arg0, %c0_i32, %c0_i32_0 : i32, i32, i32
  }
  func.func @transform_1(%arg0: i32) -> (i32, i32, i32) {
    %c0_i32 = arith.constant 0 : i32
    %c0_i32_0 = arith.constant 0 : i32
    %c0_i32_1 = arith.constant 0 : i32
    return %arg0, %c0_i32, %c0_i32_0 : i32, i32, i32
  }
  func.func @transform_2(%arg0: i32) -> (i32, i32, i32) {
    %c0_i32 = arith.constant 0 : i32
    %c0_i32_0 = arith.constant 0 : i32
    %c0_i32_1 = arith.constant 0 : i32
    return %arg0, %c0_i32, %c0_i32_0 : i32, i32, i32
  }
  func.func @transform_3(%arg0: i32) -> (i32, i32, i32) {
    %c0_i32 = arith.constant 0 : i32
    %c0_i32_0 = arith.constant 0 : i32
    %c0_i32_1 = arith.constant 0 : i32
    return %arg0, %c0_i32, %c0_i32_0 : i32, i32, i32
  }
  func.func @transform_4(%arg0: i32) -> (i32, i32, i32, i32) {
    %c0_i32 = arith.constant 0 : i32
    %c0_i32_0 = arith.constant 0 : i32
    %c0_i32_1 = arith.constant 0 : i32
    %c0_i32_2 = arith.constant 0 : i32
    return %arg0, %c0_i32, %c0_i32_0, %c0_i32_1 : i32, i32, i32, i32
  }
}

</mosaic_0001>

<llo_original>
// kernel: tpu_custom_call.1
$region0: #{tpu_custom_call.1}
  #allocation0 [shape = 'u32[]', space=smem, size = 0x4, offset = 0x4, fixed_abs, tag = 'smem constant byte address 0x4 - core index']
  #allocation1 [shape = 'u32[144,128]{1,0:T(1,128)}', space=vmem, size = 0x12000, scoped, tag = 'internal scratch']
  %s0 = inlined_call_operand.hbm [shape: f32[2,8,32], index: 0, kind: input, shape index: {}]
  %s1 = inlined_call_operand.hbm [shape: f32[2,8,32], index: 1, kind: input, shape index: {}]
  %s2 = inlined_call_operand.hbm [shape: f32[2,8,32], index: 2, kind: input, shape index: {}]
  %s3 = inlined_call_operand.hbm [shape: f32[2,8,32], index: 3, kind: output, shape index: {0}]
  %s4 = inlined_call_operand.hbm [shape: f32[2,4,8,8], index: 4, kind: output, shape index: {1}]
  %5 = xla_tuple %s3, %s4
  %s6 = sld [smem:[#allocation0]]
  $region65: #{tpu_custom_call.1} parent=0
    _
  %s8 = ssub.s32 1, %s6
  %s9 = scalar_select 0, %s8, %s6
  $region1: #{tpu_custom_call.1} parent=0
    #allocation2 [shape = 'u8[8192]{0}', space=vmem, size = 0x2000, scoped, tag = 'input window, operand 0']
    #allocation3 [shape = 's32[2]{0}', space=sflag, size = 0x8, scoped, tag = 'scoped memory for tpu_custom_call.1']
    #allocation4 [shape = 's32[2]{0}', space=sflag, size = 0x8, scoped, tag = 'scoped memory for tpu_custom_call.1']
    #allocation5 [shape = 'u8[8192]{0}', space=vmem, size = 0x2000, scoped, tag = 'input window, operand 1']
    #allocation6 [shape = 's32[2]{0}', space=sflag, size = 0x8, scoped, tag = 'scoped memory for tpu_custom_call.1']
    #allocation7 [shape = 'u8[8192]{0}', space=vmem, size = 0x2000, scoped, tag = 'input window, operand 2']
    #allocation8 [shape = 'u8[8192]{0}', space=vmem, size = 0x2000, scoped, tag = 'output window, operand 0']
    #allocation9 [shape = 'u8[32768]{0}', space=vmem, size = 0x8000, scoped, tag = 'output window, operand 1']
    #allocation10 [shape = 's32[2]{0}', space=sflag, size = 0x8, scoped, tag = 'scoped memory for tpu_custom_call.1']
    %10 = vsyncpa [#allocation3], 0
    %s11 = scalar_lea.sflag [#allocation3], 1
    %12 = vsyncpa %s11, 0
    %13 = vsyncpa [#allocation6], 0
    %s14 = scalar_lea.sflag [#allocation6], 1
    %15 = vsyncpa %s14, 0
    %16 = vsyncpa [#allocation4], 0
    %s17 = scalar_lea.sflag [#allocation4], 1
    %18 = vsyncpa %s17, 0
    %19 = vsyncpa [#allocation10], 0
    %s20 = scalar_lea.sflag [#allocation10], 1
    %21 = vsyncpa %s20, 0
    loop: start=0, step=1, limit=4
    $region2: #{tpu_custom_call.1} parent=1 // loop_pre_header
      _
    $region3: #{tpu_custom_call.1} parent=1 // loop_header
      %s23 = sphi 0, %s27
      %p24 = scmp.ge.s32.totalorder %s23, 4
      %s33 = sphi 0, %s35
      %s36 = sphi 0, %s33
      %s37 = sphi 0, %s36
      %s53 = sphi 0, %s37
      %s59 = sphi 0, %s61
      %s62 = sphi 0, %s59
      %s63 = sphi 0, %s62
      %s79 = sphi 0, %s63
      %s85 = sphi 0, %s87
      %s88 = sphi 0, %s85
      %s89 = sphi 0, %s88
      %s105 = sphi 0, %s89
      %s111 = sphi 0, %s113
      %s114 = sphi 0, %s111
      %s115 = sphi 0, %s114
      %s131 = sphi 0, %s115
      %s137 = sphi 0, %s139
      %s140 = sphi 0, %s137
      %s141 = sphi 0, %s140
      %s157 = sphi 0, %s141
    $region4: #{tpu_custom_call.1} parent=1 // loop_header_branch
      %26 = sbr.rel (%p24) target = $region8
    $region5: #{tpu_custom_call.1} parent=1 // loop_body
      %s28 = ssub.s32 %s23, 1
      %s29 = ssub.s32 %s23, 2
      %s30 = sadd.s32 %s23, 1
      %s31 = ssub.s32 %s23, %s30
      %p32 = scmp.eq.s32.totalorder %s31, 0
      %s34 = sadd.s32 %s33, 1
      %s35 = scalar_select %p32, %s33, %s34
      %p38 = pneg %p32
      %p39 = scmp.eq.s32.totalorder %s23, 1
      %p40 = por %p38, %p39
      %p41 = scmp.ne.s32.totalorder %s33, %s36
      %p42 = scmp.eq.s32.totalorder %s23, 0
      %p43 = por %p41, %p42
      %p44 = scmp.ne.s32.totalorder %s33, %s36
      %p45 = scmp.eq.s32.totalorder %s28, 1
      %p46 = por %p44, %p45
      %p47 = scmp.ne.s32.totalorder %s36, %s37
      %p48 = scmp.eq.s32.totalorder %s28, 0
      %p49 = por %p47, %p48
      %p50 = scmp.ne.s32.totalorder %s36, %s37
      %p51 = scmp.eq.s32.totalorder %s29, 1
      %p52 = por %p50, %p51
      %p54 = scmp.ne.s32.totalorder %s37, %s53
      %p55 = scmp.eq.s32.totalorder %s29, 0
      %p56 = por %p54, %p55
      %s57 = ssub.s32 %s23, %s30
      %p58 = scmp.eq.s32.totalorder %s57, 0
      %s60 = sadd.s32 %s59, 1
      %s61 = scalar_select %p58, %s59, %s60
      %p64 = pneg %p58
      %p65 = scmp.eq.s32.totalorder %s23, 1
      %p66 = por %p64, %p65
      %p67 = scmp.ne.s32.totalorder %s59, %s62
      %p68 = scmp.eq.s32.totalorder %s23, 0
      %p69 = por %p67, %p68
      %p70 = scmp.ne.s32.totalorder %s59, %s62
      %p71 = scmp.eq.s32.totalorder %s28, 1
      %p72 = por %p70, %p71
      %p73 = scmp.ne.s32.totalorder %s62, %s63
      %p74 = scmp.eq.s32.totalorder %s28, 0
      %p75 = por %p73, %p74
      %p76 = scmp.ne.s32.totalorder %s62, %s63
      %p77 = scmp.eq.s32.totalorder %s29, 1
      %p78 = por %p76, %p77
      %p80 = scmp.ne.s32.totalorder %s63, %s79
      %p81 = scmp.eq.s32.totalorder %s29, 0
      %p82 = por %p80, %p81
      %s83 = ssub.s32 %s23, %s30
      %p84 = scmp.eq.s32.totalorder %s83, 0
      %s86 = sadd.s32 %s85, 1
      %s87 = scalar_select %p84, %s85, %s86
      %p90 = pneg %p84
      %p91 = scmp.eq.s32.totalorder %s23, 1
      %p92 = por %p90, %p91
      %p93 = scmp.ne.s32.totalorder %s85, %s88
      %p94 = scmp.eq.s32.totalorder %s23, 0
      %p95 = por %p93, %p94
      %p96 = scmp.ne.s32.totalorder %s85, %s88
      %p97 = scmp.eq.s32.totalorder %s28, 1
      %p98 = por %p96, %p97
      %p99 = scmp.ne.s32.totalorder %s88, %s89
      %p100 = scmp.eq.s32.totalorder %s28, 0
      %p101 = por %p99, %p100
      %p102 = scmp.ne.s32.totalorder %s88, %s89
      %p103 = scmp.eq.s32.totalorder %s29, 1
      %p104 = por %p102, %p103
      %p106 = scmp.ne.s32.totalorder %s89, %s105
      %p107 = scmp.eq.s32.totalorder %s29, 0
      %p108 = por %p106, %p107
      %s109 = ssub.s32 %s23, %s30
      %p110 = scmp.eq.s32.totalorder %s109, 0
      %s112 = sadd.s32 %s111, 1
      %s113 = scalar_select %p110, %s111, %s112
      %p116 = pneg %p110
      %p117 = scmp.eq.s32.totalorder %s23, 1
      %p118 = por %p116, %p117
      %p119 = scmp.ne.s32.totalorder %s111, %s114
      %p120 = scmp.eq.s32.totalorder %s23, 0
      %p121 = por %p119, %p120
      %p122 = scmp.ne.s32.totalorder %s111, %s114
      %p123 = scmp.eq.s32.totalorder %s28, 1
      %p124 = por %p122, %p123
      %p125 = scmp.ne.s32.totalorder %s114, %s115
      %p126 = scmp.eq.s32.totalorder %s28, 0
      %p127 = por %p125, %p126
      %p128 = scmp.ne.s32.totalorder %s114, %s115
      %p129 = scmp.eq.s32.totalorder %s29, 1
      %p130 = por %p128, %p129
      %p132 = scmp.ne.s32.totalorder %s115, %s131
      %p133 = scmp.eq.s32.totalorder %s29, 0
      %p134 = por %p132, %p133
      %s135 = ssub.s32 %s23, %s30
      %p136 = scmp.eq.s32.totalorder %s135, 0
      %s138 = sadd.s32 %s137, 1
      %s139 = scalar_select %p136, %s137, %s138
      %p142 = pneg %p136
      %p143 = scmp.eq.s32.totalorder %s23, 1
      %p144 = por %p142, %p143
      %p145 = scmp.ne.s32.totalorder %s137, %s140
      %p146 = scmp.eq.s32.totalorder %s23, 0
      %p147 = por %p145, %p146
      %p148 = scmp.ne.s32.totalorder %s137, %s140
      %p149 = scmp.eq.s32.totalorder %s28, 1
      %p150 = por %p148, %p149
      %p151 = scmp.ne.s32.totalorder %s140, %s141
      %p152 = scmp.eq.s32.totalorder %s28, 0
      %p153 = por %p151, %p152
      %p154 = scmp.ne.s32.totalorder %s140, %s141
      %p155 = scmp.eq.s32.totalorder %s29, 1
      %p156 = por %p154, %p155
      %p158 = scmp.ne.s32.totalorder %s141, %s157
      %p159 = scmp.eq.s32.totalorder %s29, 0
      %p160 = por %p158, %p159
      %p161 = scmp.le.s32.totalorder 1, %s23
      %p162 = scmp.lt.s32.totalorder %s23, 3
      %p163 = pnand %p161, %p162
      %p164 = pneg %p163
      // Predicated region
      $region9: #{tpu_custom_call.1} parent=5 // pred_check
        _
      $region10: #{tpu_custom_call.1} parent=5 // pred_check_branch
        %166 = sbr.rel (%p163) target = $region12
      $region11: #{tpu_custom_call.1} parent=5 // pred_region
        %s167 = ssub.s32 %s23, 1
      $region12: #{tpu_custom_call.1} parent=5 // pred_fallthru
        _
      %p168 = scmp.lt.s32.totalorder %s23, 2
      // Predicated region
      $region13: #{tpu_custom_call.1} parent=5 // pred_check
        %p169 = pneg %p168
      $region14: #{tpu_custom_call.1} parent=5 // pred_check_branch
        %171 = sbr.rel (%p169) target = $region16
      $region15: #{tpu_custom_call.1} parent=5 // pred_region
        // Predicated region
        $region17: #{tpu_custom_call.1} parent=15 // pred_check
          %p172 = pneg %p43
        $region18: #{tpu_custom_call.1} parent=15 // pred_check_branch
          %174 = sbr.rel (%p172) target = $region20
        $region19: #{tpu_custom_call.1} parent=15 // pred_region
          %s175 = sand.u32 %s33, 1
          %s176 = scalar_lea.sflag [#allocation3], %s175
          %s177 = sand.u32 %s33, 1
          %s178 = smul.addr %s177, 8
          %s179 = scalar_lea.vmem [#allocation2], %s178
          %s181 = ssub.s32 128, 128
          %182 = vsyncadd %s176, %s181
          %s183 = smul.addr %s23, 128
          %s184 = scalar_lea.hbm %s0, %s183
          %s186 = sshll.u32 %s179, 4
          %s187 = int_to_ptr.vmem [resolvable:$true] %s186
          %189 = dma.hbm_to_vmem [thread:$0]  %s184, 128, %s187, %s176
        $region20: #{tpu_custom_call.1} parent=15 // pred_fallthru
          _
        // Predicated region
        $region21: #{tpu_custom_call.1} parent=15 // pred_check
          %p190 = pneg %p69
        $region22: #{tpu_custom_call.1} parent=15 // pred_check_branch
          %192 = sbr.rel (%p190) target = $region24
        $region23: #{tpu_custom_call.1} parent=15 // pred_region
          %s193 = sand.u32 %s23, 1
          %s194 = scalar_lea.sflag [#allocation6], %s193
          %s195 = sand.u32 %s59, 1
          %s196 = smul.addr %s195, 8
          %s197 = scalar_lea.vmem [#allocation5], %s196
          %s199 = ssub.s32 128, 128
          %200 = vsyncadd %s194, %s199
          %s201 = smul.addr %s23, 128
          %s202 = scalar_lea.hbm %s1, %s201
          %s204 = sshll.u32 %s197, 4
          %s205 = int_to_ptr.vmem [resolvable:$true] %s204
          %207 = dma.hbm_to_vmem [thread:$0]  %s202, 128, %s205, %s194
        $region24: #{tpu_custom_call.1} parent=15 // pred_fallthru
          _
        // Predicated region
        $region25: #{tpu_custom_call.1} parent=15 // pred_check
          %p208 = pneg %p95
        $region26: #{tpu_custom_call.1} parent=15 // pred_check_branch
          %210 = sbr.rel (%p208) target = $region28
        $region27: #{tpu_custom_call.1} parent=15 // pred_region
          %s211 = sand.u32 %s23, 1
          %s212 = scalar_lea.sflag [#allocation6], %s211
          %s213 = sand.u32 %s85, 1
          %s214 = smul.addr %s213, 8
          %s215 = scalar_lea.vmem [#allocation7], %s214
          %s217 = ssub.s32 128, 128
          %218 = vsyncadd %s212, %s217
          %s219 = smul.addr %s23, 128
          %s220 = scalar_lea.hbm %s2, %s219
          %s222 = sshll.u32 %s215, 4
          %s223 = int_to_ptr.vmem [resolvable:$true] %s222
          %225 = dma.hbm_to_vmem [thread:$0]  %s220, 128, %s223, %s212
        $region28: #{tpu_custom_call.1} parent=15 // pred_fallthru
          _
      $region16: #{tpu_custom_call.1} parent=5 // pred_fallthru
        _
      %p226 = scmp.le.s32.totalorder 1, %s23
      %p227 = scmp.lt.s32.totalorder %s23, 3
      %p228 = pnand %p226, %p227
      %p229 = pneg %p228
      // Predicated region
      $region29: #{tpu_custom_call.1} parent=5 // pred_check
        _
      $region30: #{tpu_custom_call.1} parent=5 // pred_check_branch
        %231 = sbr.rel (%p228) target = $region32
      $region31: #{tpu_custom_call.1} parent=5 // pred_region
        %s232 = ssub.s32 %s23, 1
        %s233 = sand.u32 %s36, 1
        %s234 = scalar_lea.sflag [#allocation3], %s233
        %s235 = sand.u32 %s36, 1
        %s236 = smul.addr %s235, 8
        %s237 = scalar_lea.vmem [#allocation2], %s236
        // Predicated region
        $region33: #{tpu_custom_call.1} parent=31 // pred_check
          %p238 = pneg %p49
        $region34: #{tpu_custom_call.1} parent=31 // pred_check_branch
          %240 = sbr.rel (%p238) target = $region36
        $region35: #{tpu_custom_call.1} parent=31 // pred_region
          %241 = dma.done %s234, 128
        $region36: #{tpu_custom_call.1} parent=31 // pred_fallthru
          _
        %s242 = sand.u32 %s28, 1
        %s243 = scalar_lea.sflag [#allocation6], %s242
        %s244 = sand.u32 %s62, 1
        %s245 = smul.addr %s244, 8
        %s246 = scalar_lea.vmem [#allocation5], %s245
        // Predicated region
        $region37: #{tpu_custom_call.1} parent=31 // pred_check
          %p247 = pneg %p75
        $region38: #{tpu_custom_call.1} parent=31 // pred_check_branch
          %249 = sbr.rel (%p247) target = $region40
        $region39: #{tpu_custom_call.1} parent=31 // pred_region
          %250 = dma.done %s243, 128
        $region40: #{tpu_custom_call.1} parent=31 // pred_fallthru
          _
        %s251 = sand.u32 %s28, 1
        %s252 = scalar_lea.sflag [#allocation6], %s251
        %s253 = sand.u32 %s88, 1
        %s254 = smul.addr %s253, 8
        %s255 = scalar_lea.vmem [#allocation7], %s254
        // Predicated region
        $region41: #{tpu_custom_call.1} parent=31 // pred_check
          %p256 = pneg %p101
        $region42: #{tpu_custom_call.1} parent=31 // pred_check_branch
          %258 = sbr.rel (%p256) target = $region44
        $region43: #{tpu_custom_call.1} parent=31 // pred_region
          %259 = dma.done %s252, 128
        $region44: #{tpu_custom_call.1} parent=31 // pred_fallthru
          _
        %s260 = sand.u32 %s36, 1
        %s261 = scalar_lea.sflag [#allocation3], %s260
        %s262 = sand.u32 %s36, 1
        %s263 = smul.addr %s262, 8
        %s264 = scalar_lea.vmem [#allocation2], %s263
        %p265 = pneg %p49
        %p266 = pneg %p46
        %s267 = sand.u32 %s28, 1
        %s268 = scalar_lea.sflag [#allocation6], %s267
        %s269 = sand.u32 %s62, 1
        %s270 = smul.addr %s269, 8
        %s271 = scalar_lea.vmem [#allocation5], %s270
        %p272 = pneg %p75
        %p273 = pneg %p72
        %s274 = sand.u32 %s28, 1
        %s275 = scalar_lea.sflag [#allocation6], %s274
        %s276 = sand.u32 %s88, 1
        %s277 = smul.addr %s276, 8
        %s278 = scalar_lea.vmem [#allocation7], %s277
        %p279 = pneg %p101
        %p280 = pneg %p98
        %p281 = pneg %p127
        %p282 = pneg %p124
        %s283 = sand.u32 %s114, 1
        %s284 = scalar_lea.sflag [#allocation4], %s283
        %s285 = sand.u32 %s114, 1
        %s286 = smul.addr %s285, 8
        %s287 = scalar_lea.vmem [#allocation8], %s286
        %p288 = pneg %p153
        %p289 = pneg %p150
        %s290 = sand.u32 %s140, 1
        %s291 = scalar_lea.sflag [#allocation10], %s290
        %s292 = sand.u32 %s140, 1
        %s293 = smul.addr %s292, 32
        %s294 = scalar_lea.vmem [#allocation9], %s293
        %v295 = vld [vmem:[%s237] sm:$0xff]
        %v296 = vmul.f32 %v295, 0.35355338
        %v297 = vld [vmem:[%s246] sm:$0xff]
        %v298 = vld [vmem:[%s255] sm:$0xff]
        %v299 = vlaneseq
        %v300 = vshrl.u32 %v299, 7
        %v301 = vlaneseq
        %v302 = vand.u32 %v301, 127
        %vm303 = vcmp.le.s32.totalorder %v302, %v300
        %vm304 = vcmask 64512
        %v306 = vsel %vm304, %v296, 0
        %v309 = vsel %vm304, %v297, 0
        %311 = vmatprep.subr.mxu0 0.0
        %312 = vmatpush1.xpose.msra.mxu0 %v309
        %313 = vmatprep.subr.mxu0 0.0
        %314 = vmatpush1.xpose.msra.mxu0 0.0
        %315 = vmatprep.subr.mxu0 0.0
        %316 = vmatpush1.xpose.msra.mxu0 0.0
        %317 = vmatprep.subr.mxu0 0.0
        %318 = vmatpush1.xpose.msra.mxu0 0.0
        %319 = vmatprep.subr.mxu0 0.0
        %320 = vmatpush1.xpose.msra.mxu0 0.0
        %321 = vmatprep.subr.mxu0 0.0
        %322 = vmatpush1.xpose.msra.mxu0 0.0
        %323 = vmatprep.subr.mxu0 0.0
        %324 = vmatpush1.xpose.msra.mxu0 0.0
        %325 = vmatprep.subr.mxu0 0.0
        %326 = vmatpush1.xpose.msra.mxu0 0.0
        %327 = vmatprep.subr.mxu0 0.0
        %328 = vmatpush1.xpose.msra.mxu0 0.0
        %329 = vmatprep.subr.mxu0 0.0
        %330 = vmatpush1.xpose.msra.mxu0 0.0
        %331 = vmatprep.subr.mxu0 0.0
        %332 = vmatpush1.xpose.msra.mxu0 0.0
        %333 = vmatprep.subr.mxu0 0.0
        %334 = vmatpush1.xpose.msra.mxu0 0.0
        %335 = vmatprep.subr.mxu0 0.0
        %336 = vmatpush1.xpose.msra.mxu0 0.0
        %337 = vmatprep.subr.mxu0 0.0
        %338 = vmatpush1.xpose.msra.mxu0 0.0
        %339 = vmatprep.subr.mxu0 0.0
        %340 = vmatpush1.xpose.msra.mxu0 0.0
        %341 = vmatprep.subr.mxu0 0.0
        %342 = vmatpush1.xpose.msra.mxu0 0.0
        %343 = vmatprep.subr.mxu0 0.0
        %344 = vmatpush1.xpose.msra.mxu0 0.0
        %345 = vmatprep.subr.mxu0 0.0
        %346 = vmatpush1.xpose.msra.mxu0 0.0
        %347 = vmatprep.subr.mxu0 0.0
        %348 = vmatpush1.xpose.msra.mxu0 0.0
        %349 = vmatprep.subr.mxu0 0.0
        %350 = vmatpush1.xpose.msra.mxu0 0.0
        %351 = vmatprep.subr.mxu0 0.0
        %352 = vmatpush1.xpose.msra.mxu0 0.0
        %353 = vmatprep.subr.mxu0 0.0
        %354 = vmatpush1.xpose.msra.mxu0 0.0
        %355 = vmatprep.subr.mxu0 0.0
        %356 = vmatpush1.xpose.msra.mxu0 0.0
        %357 = vmatprep.subr.mxu0 0.0
        %358 = vmatpush1.xpose.msra.mxu0 0.0
        %359 = vmatprep.subr.mxu0 0.0
        %360 = vmatpush1.xpose.msra.mxu0 0.0
        %361 = vmatprep.subr.mxu0 0.0
        %362 = vmatpush1.xpose.msra.mxu0 0.0
        %363 = vmatprep.subr.mxu0 0.0
        %364 = vmatpush1.xpose.msra.mxu0 0.0
        %365 = vmatprep.subr.mxu0 0.0
        %366 = vmatpush1.xpose.msra.mxu0 0.0
        %367 = vmatprep.subr.mxu0 0.0
        %368 = vmatpush1.xpose.msra.mxu0 0.0
        %369 = vmatprep.subr.mxu0 0.0
        %370 = vmatpush1.xpose.msra.mxu0 0.0
        %371 = vmatprep.subr.mxu0 0.0
        %372 = vmatpush1.xpose.msra.mxu0 0.0
        %373 = vmatprep.subr.mxu0 0.0
        %374 = vmatpush1.xpose.msra.mxu0 0.0
        %375 = vmatprep.mubr.f32.mxu0 0.0
        %376 = vmatmul.mubr.f32.gmra.mrb[0].mxu0 %v306
        %v377 = vpop.f32.mrb[0].mxu0
        %v378 = vadd.f32 0.0, %v377
        %v379 = vpop.f32.mrb[0].mxu0
        %380 = vdwg.mxu0
        %v381 = vsel %vm303, %v378, -1e+20
        %v382 = vsel %vm304, %v381, -inf
        %383 = vmax.xlane.f32.xlu0 %v382
        %v384 = vpop.xlane.xlu0 %383
        %v385 = vsub.f32 %v381, %v384
        %v386 = vmul.f32 %v385, 1.442695
        %v387 = vpow.pop %v386
        %v388 = vsel %vm304, %v387, 0.0
        %389 = vadd.xlane.f32.xlu0 %v388
        %v390 = vpop.xlane.xlu0 %389
        %v391 = vrcp.pop %v390
        %v392 = vmul.f32 %v387, %v391
        %393 = vst.msk [vmem:[%s294] sm:$0xff] %vm304, %v392
        %v395 = vsel %vm304, %v392, 0
        %397 = vmatprep.subr.mxu0 0.0
        %398 = vmatpush1.msra.mxu0 %v298
        %399 = vmatprep.subr.mxu0 0.0
        %400 = vmatpush1.msra.mxu0 0.0
        %401 = vmatprep.subr.mxu0 0.0
        %402 = vmatpush1.msra.mxu0 0.0
        %403 = vmatprep.subr.mxu0 0.0
        %404 = vmatpush1.msra.mxu0 0.0
        %405 = vmatprep.subr.mxu0 0.0
        %406 = vmatpush1.msra.mxu0 0.0
        %407 = vmatprep.subr.mxu0 0.0
        %408 = vmatpush1.msra.mxu0 0.0
        %409 = vmatprep.subr.mxu0 0.0
        %410 = vmatpush1.msra.mxu0 0.0
        %411 = vmatprep.subr.mxu0 0.0
        %412 = vmatpush1.msra.mxu0 0.0
        %413 = vmatprep.subr.mxu0 0.0
        %414 = vmatpush1.msra.mxu0 0.0
        %415 = vmatprep.subr.mxu0 0.0
        %416 = vmatpush1.msra.mxu0 0.0
        %417 = vmatprep.subr.mxu0 0.0
        %418 = vmatpush1.msra.mxu0 0.0
        %419 = vmatprep.subr.mxu0 0.0
        %420 = vmatpush1.msra.mxu0 0.0
        %421 = vmatprep.subr.mxu0 0.0
        %422 = vmatpush1.msra.mxu0 0.0
        %423 = vmatprep.subr.mxu0 0.0
        %424 = vmatpush1.msra.mxu0 0.0
        %425 = vmatprep.subr.mxu0 0.0
        %426 = vmatpush1.msra.mxu0 0.0
        %427 = vmatprep.subr.mxu0 0.0
        %428 = vmatpush1.msra.mxu0 0.0
        %429 = vmatprep.subr.mxu0 0.0
        %430 = vmatpush1.msra.mxu0 0.0
        %431 = vmatprep.subr.mxu0 0.0
        %432 = vmatpush1.msra.mxu0 0.0
        %433 = vmatprep.subr.mxu0 0.0
        %434 = vmatpush1.msra.mxu0 0.0
        %435 = vmatprep.subr.mxu0 0.0
        %436 = vmatpush1.msra.mxu0 0.0
        %437 = vmatprep.subr.mxu0 0.0
        %438 = vmatpush1.msra.mxu0 0.0
        %439 = vmatprep.subr.mxu0 0.0
        %440 = vmatpush1.msra.mxu0 0.0
        %441 = vmatprep.subr.mxu0 0.0
        %442 = vmatpush1.msra.mxu0 0.0
        %443 = vmatprep.subr.mxu0 0.0
        %444 = vmatpush1.msra.mxu0 0.0
        %445 = vmatprep.subr.mxu0 0.0
        %446 = vmatpush1.msra.mxu0 0.0
        %447 = vmatprep.subr.mxu0 0.0
        %448 = vmatpush1.msra.mxu0 0.0
        %449 = vmatprep.subr.mxu0 0.0
        %450 = vmatpush1.msra.mxu0 0.0
        %451 = vmatprep.subr.mxu0 0.0
        %452 = vmatpush1.msra.mxu0 0.0
        %453 = vmatprep.subr.mxu0 0.0
        %454 = vmatpush1.msra.mxu0 0.0
        %455 = vmatprep.subr.mxu0 0.0
        %456 = vmatpush1.msra.mxu0 0.0
        %457 = vmatprep.subr.mxu0 0.0
        %458 = vmatpush1.msra.mxu0 0.0
        %459 = vmatprep.subr.mxu0 0.0
        %460 = vmatpush1.msra.mxu0 0.0
        %461 = vmatprep.mubr.f32.mxu0 0.0
        %462 = vmatmul.mubr.f32.gmra.mrb[0].mxu0 %v395
        %v463 = vpop.f32.mrb[0].mxu0
        %v464 = vadd.f32 0.0, %v463
        %v465 = vpop.f32.mrb[0].mxu0
        %466 = vdwg.mxu0
        %467 = vrot.lane.b32.xlu0 %v296, 120
        %v468 = vpop.permute.xlu0 %467
        %469 = vrot.lane.b32.xlu0 %v297, 120
        %v470 = vpop.permute.xlu0 %469
        %v471 = vsel %vm304, %v468, 0
        %v473 = vsel %vm304, %v470, 0
        %475 = vmatprep.subr.mxu0 0.0
        %476 = vmatpush1.xpose.msra.mxu0 %v473
        %477 = vmatprep.subr.mxu0 0.0
        %478 = vmatpush1.xpose.msra.mxu0 0.0
        %479 = vmatprep.subr.mxu0 0.0
        %480 = vmatpush1.xpose.msra.mxu0 0.0
        %481 = vmatprep.subr.mxu0 0.0
        %482 = vmatpush1.xpose.msra.mxu0 0.0
        %483 = vmatprep.subr.mxu0 0.0
        %484 = vmatpush1.xpose.msra.mxu0 0.0
        %485 = vmatprep.subr.mxu0 0.0
        %486 = vmatpush1.xpose.msra.mxu0 0.0
        %487 = vmatprep.subr.mxu0 0.0
        %488 = vmatpush1.xpose.msra.mxu0 0.0
        %489 = vmatprep.subr.mxu0 0.0
        %490 = vmatpush1.xpose.msra.mxu0 0.0
        %491 = vmatprep.subr.mxu0 0.0
        %492 = vmatpush1.xpose.msra.mxu0 0.0
        %493 = vmatprep.subr.mxu0 0.0
        %494 = vmatpush1.xpose.msra.mxu0 0.0
        %495 = vmatprep.subr.mxu0 0.0
        %496 = vmatpush1.xpose.msra.mxu0 0.0
        %497 = vmatprep.subr.mxu0 0.0
        %498 = vmatpush1.xpose.msra.mxu0 0.0
        %499 = vmatprep.subr.mxu0 0.0
        %500 = vmatpush1.xpose.msra.mxu0 0.0
        %501 = vmatprep.subr.mxu0 0.0
        %502 = vmatpush1.xpose.msra.mxu0 0.0
        %503 = vmatprep.subr.mxu0 0.0
        %504 = vmatpush1.xpose.msra.mxu0 0.0
        %505 = vmatprep.subr.mxu0 0.0
        %506 = vmatpush1.xpose.msra.mxu0 0.0
        %507 = vmatprep.subr.mxu0 0.0
        %508 = vmatpush1.xpose.msra.mxu0 0.0
        %509 = vmatprep.subr.mxu0 0.0
        %510 = vmatpush1.xpose.msra.mxu0 0.0
        %511 = vmatprep.subr.mxu0 0.0
        %512 = vmatpush1.xpose.msra.mxu0 0.0
        %513 = vmatprep.subr.mxu0 0.0
        %514 = vmatpush1.xpose.msra.mxu0 0.0
        %515 = vmatprep.subr.mxu0 0.0
        %516 = vmatpush1.xpose.msra.mxu0 0.0
        %517 = vmatprep.subr.mxu0 0.0
        %518 = vmatpush1.xpose.msra.mxu0 0.0
        %519 = vmatprep.subr.mxu0 0.0
        %520 = vmatpush1.xpose.msra.mxu0 0.0
        %521 = vmatprep.subr.mxu0 0.0
        %522 = vmatpush1.xpose.msra.mxu0 0.0
        %523 = vmatprep.subr.mxu0 0.0
        %524 = vmatpush1.xpose.msra.mxu0 0.0
        %525 = vmatprep.subr.mxu0 0.0
        %526 = vmatpush1.xpose.msra.mxu0 0.0
        %527 = vmatprep.subr.mxu0 0.0
        %528 = vmatpush1.xpose.msra.mxu0 0.0
        %529 = vmatprep.subr.mxu0 0.0
        %530 = vmatpush1.xpose.msra.mxu0 0.0
        %531 = vmatprep.subr.mxu0 0.0
        %532 = vmatpush1.xpose.msra.mxu0 0.0
        %533 = vmatprep.subr.mxu0 0.0
        %534 = vmatpush1.xpose.msra.mxu0 0.0
        %535 = vmatprep.subr.mxu0 0.0
        %536 = vmatpush1.xpose.msra.mxu0 0.0
        %537 = vmatprep.subr.mxu0 0.0
        %538 = vmatpush1.xpose.msra.mxu0 0.0
        %539 = vmatprep.mubr.f32.mxu0 0.0
        %540 = vmatmul.mubr.f32.gmra.mrb[0].mxu0 %v471
        %v541 = vpop.f32.mrb[0].mxu0
        %v542 = vadd.f32 0.0, %v541
        %v543 = vpop.f32.mrb[0].mxu0
        %544 = vdwg.mxu0
        %v545 = vsel %vm303, %v542, -1e+20
        %v546 = vsel %vm304, %v545, -inf
        %547 = vmax.xlane.f32.xlu0 %v546
        %v548 = vpop.xlane.xlu0 %547
        %v549 = vsub.f32 %v545, %v548
        %v550 = vmul.f32 %v549, 1.442695
        %v551 = vpow.pop %v550
        %v552 = vsel %vm304, %v551, 0.0
        %553 = vadd.xlane.f32.xlu0 %v552
        %v554 = vpop.xlane.xlu0 %553
        %v555 = vrcp.pop %v554
        %v556 = vmul.f32 %v551, %v555
        %s557 = scalar_lea.vmem %s294, 8 [#allocation9]
        %558 = vst.msk [vmem:[%s557] sm:$0xff] %vm304, %v556
        %560 = vrot.lane.b32.xlu0 %v298, 120
        %v561 = vpop.permute.xlu0 %560
        %v564 = vsel %vm304, %v556, 0
        %566 = vmatprep.subr.mxu0 0.0
        %567 = vmatpush1.msra.mxu0 %v561
        %568 = vmatprep.subr.mxu0 0.0
        %569 = vmatpush1.msra.mxu0 0.0
        %570 = vmatprep.subr.mxu0 0.0
        %571 = vmatpush1.msra.mxu0 0.0
        %572 = vmatprep.subr.mxu0 0.0
        %573 = vmatpush1.msra.mxu0 0.0
        %574 = vmatprep.subr.mxu0 0.0
        %575 = vmatpush1.msra.mxu0 0.0
        %576 = vmatprep.subr.mxu0 0.0
        %577 = vmatpush1.msra.mxu0 0.0
        %578 = vmatprep.subr.mxu0 0.0
        %579 = vmatpush1.msra.mxu0 0.0
        %580 = vmatprep.subr.mxu0 0.0
        %581 = vmatpush1.msra.mxu0 0.0
        %582 = vmatprep.subr.mxu0 0.0
        %583 = vmatpush1.msra.mxu0 0.0
        %584 = vmatprep.subr.mxu0 0.0
        %585 = vmatpush1.msra.mxu0 0.0
        %586 = vmatprep.subr.mxu0 0.0
        %587 = vmatpush1.msra.mxu0 0.0
        %588 = vmatprep.subr.mxu0 0.0
        %589 = vmatpush1.msra.mxu0 0.0
        %590 = vmatprep.subr.mxu0 0.0
        %591 = vmatpush1.msra.mxu0 0.0
        %592 = vmatprep.subr.mxu0 0.0
        %593 = vmatpush1.msra.mxu0 0.0
        %594 = vmatprep.subr.mxu0 0.0
        %595 = vmatpush1.msra.mxu0 0.0
        %596 = vmatprep.subr.mxu0 0.0
        %597 = vmatpush1.msra.mxu0 0.0
        %598 = vmatprep.subr.mxu0 0.0
        %599 = vmatpush1.msra.mxu0 0.0
        %600 = vmatprep.subr.mxu0 0.0
        %601 = vmatpush1.msra.mxu0 0.0
        %602 = vmatprep.subr.mxu0 0.0
        %603 = vmatpush1.msra.mxu0 0.0
        %604 = vmatprep.subr.mxu0 0.0
        %605 = vmatpush1.msra.mxu0 0.0
        %606 = vmatprep.subr.mxu0 0.0
        %607 = vmatpush1.msra.mxu0 0.0
        %608 = vmatprep.subr.mxu0 0.0
        %609 = vmatpush1.msra.mxu0 0.0
        %610 = vmatprep.subr.mxu0 0.0
        %611 = vmatpush1.msra.mxu0 0.0
        %612 = vmatprep.subr.mxu0 0.0
        %613 = vmatpush1.msra.mxu0 0.0
        %614 = vmatprep.subr.mxu0 0.0
        %615 = vmatpush1.msra.mxu0 0.0
        %616 = vmatprep.subr.mxu0 0.0
        %617 = vmatpush1.msra.mxu0 0.0
        %618 = vmatprep.subr.mxu0 0.0
        %619 = vmatpush1.msra.mxu0 0.0
        %620 = vmatprep.subr.mxu0 0.0
        %621 = vmatpush1.msra.mxu0 0.0
        %622 = vmatprep.subr.mxu0 0.0
        %623 = vmatpush1.msra.mxu0 0.0
        %624 = vmatprep.subr.mxu0 0.0
        %625 = vmatpush1.msra.mxu0 0.0
        %626 = vmatprep.subr.mxu0 0.0
        %627 = vmatpush1.msra.mxu0 0.0
        %628 = vmatprep.subr.mxu0 0.0
        %629 = vmatpush1.msra.mxu0 0.0
        %630 = vmatprep.mubr.f32.mxu0 0.0
        %631 = vmatmul.mubr.f32.gmra.mrb[0].mxu0 %v564
        %v632 = vpop.f32.mrb[0].mxu0
        %v633 = vadd.f32 0.0, %v632
        %v634 = vpop.f32.mrb[0].mxu0
        %635 = vdwg.mxu0
        %636 = vrot.lane.b32.xlu0 %v296, 112
        %v637 = vpop.permute.xlu0 %636
        %638 = vrot.lane.b32.xlu0 %v297, 112
        %v639 = vpop.permute.xlu0 %638
        %v640 = vsel %vm304, %v637, 0
        %v642 = vsel %vm304, %v639, 0
        %644 = vmatprep.subr.mxu0 0.0
        %645 = vmatpush1.xpose.msra.mxu0 %v642
        %646 = vmatprep.subr.mxu0 0.0
        %647 = vmatpush1.xpose.msra.mxu0 0.0
        %648 = vmatprep.subr.mxu0 0.0
        %649 = vmatpush1.xpose.msra.mxu0 0.0
        %650 = vmatprep.subr.mxu0 0.0
        %651 = vmatpush1.xpose.msra.mxu0 0.0
        %652 = vmatprep.subr.mxu0 0.0
        %653 = vmatpush1.xpose.msra.mxu0 0.0
        %654 = vmatprep.subr.mxu0 0.0
        %655 = vmatpush1.xpose.msra.mxu0 0.0
        %656 = vmatprep.subr.mxu0 0.0
        %657 = vmatpush1.xpose.msra.mxu0 0.0
        %658 = vmatprep.subr.mxu0 0.0
        %659 = vmatpush1.xpose.msra.mxu0 0.0
        %660 = vmatprep.subr.mxu0 0.0
        %661 = vmatpush1.xpose.msra.mxu0 0.0
        %662 = vmatprep.subr.mxu0 0.0
        %663 = vmatpush1.xpose.msra.mxu0 0.0
        %664 = vmatprep.subr.mxu0 0.0
        %665 = vmatpush1.xpose.msra.mxu0 0.0
        %666 = vmatprep.subr.mxu0 0.0
        %667 = vmatpush1.xpose.msra.mxu0 0.0
        %668 = vmatprep.subr.mxu0 0.0
        %669 = vmatpush1.xpose.msra.mxu0 0.0
        %670 = vmatprep.subr.mxu0 0.0
        %671 = vmatpush1.xpose.msra.mxu0 0.0
        %672 = vmatprep.subr.mxu0 0.0
        %673 = vmatpush1.xpose.msra.mxu0 0.0
        %674 = vmatprep.subr.mxu0 0.0
        %675 = vmatpush1.xpose.msra.mxu0 0.0
        %676 = vmatprep.subr.mxu0 0.0
        %677 = vmatpush1.xpose.msra.mxu0 0.0
        %678 = vmatprep.subr.mxu0 0.0
        %679 = vmatpush1.xpose.msra.mxu0 0.0
        %680 = vmatprep.subr.mxu0 0.0
        %681 = vmatpush1.xpose.msra.mxu0 0.0
        %682 = vmatprep.subr.mxu0 0.0
        %683 = vmatpush1.xpose.msra.mxu0 0.0
        %684 = vmatprep.subr.mxu0 0.0
        %685 = vmatpush1.xpose.msra.mxu0 0.0
        %686 = vmatprep.subr.mxu0 0.0
        %687 = vmatpush1.xpose.msra.mxu0 0.0
        %688 = vmatprep.subr.mxu0 0.0
        %689 = vmatpush1.xpose.msra.mxu0 0.0
        %690 = vmatprep.subr.mxu0 0.0
        %691 = vmatpush1.xpose.msra.mxu0 0.0
        %692 = vmatprep.subr.mxu0 0.0
        %693 = vmatpush1.xpose.msra.mxu0 0.0
        %694 = vmatprep.subr.mxu0 0.0
        %695 = vmatpush1.xpose.msra.mxu0 0.0
        %696 = vmatprep.subr.mxu0 0.0
        %697 = vmatpush1.xpose.msra.mxu0 0.0
        %698 = vmatprep.subr.mxu0 0.0
        %699 = vmatpush1.xpose.msra.mxu0 0.0
        %700 = vmatprep.subr.mxu0 0.0
        %701 = vmatpush1.xpose.msra.mxu0 0.0
        %702 = vmatprep.subr.mxu0 0.0
        %703 = vmatpush1.xpose.msra.mxu0 0.0
        %704 = vmatprep.subr.mxu0 0.0
        %705 = vmatpush1.xpose.msra.mxu0 0.0
        %706 = vmatprep.subr.mxu0 0.0
        %707 = vmatpush1.xpose.msra.mxu0 0.0
        %708 = vmatprep.mubr.f32.mxu0 0.0
        %709 = vmatmul.mubr.f32.gmra.mrb[0].mxu0 %v640
        %v710 = vpop.f32.mrb[0].mxu0
        %v711 = vadd.f32 0.0, %v710
        %v712 = vpop.f32.mrb[0].mxu0
        %713 = vdwg.mxu0
        %v714 = vsel %vm303, %v711, -1e+20
        %v715 = vsel %vm304, %v714, -inf
        %716 = vmax.xlane.f32.xlu0 %v715
        %v717 = vpop.xlane.xlu0 %716
        %v718 = vsub.f32 %v714, %v717
        %v719 = vmul.f32 %v718, 1.442695
        %v720 = vpow.pop %v719
        %v721 = vsel %vm304, %v720, 0.0
        %722 = vadd.xlane.f32.xlu0 %v721
        %v723 = vpop.xlane.xlu0 %722
        %v724 = vrcp.pop %v723
        %v725 = vmul.f32 %v720, %v724
        %s726 = scalar_lea.vmem %s294, 16 [#allocation9]
        %727 = vst.msk [vmem:[%s726] sm:$0xff] %vm304, %v725
        %728 = vrot.lane.b32.xlu0 %v298, 112
        %v729 = vpop.permute.xlu0 %728
        %v732 = vsel %vm304, %v725, 0
        %734 = vmatprep.subr.mxu0 0.0
        %735 = vmatpush1.msra.mxu0 %v729
        %736 = vmatprep.subr.mxu0 0.0
        %737 = vmatpush1.msra.mxu0 0.0
        %738 = vmatprep.subr.mxu0 0.0
        %739 = vmatpush1.msra.mxu0 0.0
        %740 = vmatprep.subr.mxu0 0.0
        %741 = vmatpush1.msra.mxu0 0.0
        %742 = vmatprep.subr.mxu0 0.0
        %743 = vmatpush1.msra.mxu0 0.0
        %744 = vmatprep.subr.mxu0 0.0
        %745 = vmatpush1.msra.mxu0 0.0
        %746 = vmatprep.subr.mxu0 0.0
        %747 = vmatpush1.msra.mxu0 0.0
        %748 = vmatprep.subr.mxu0 0.0
        %749 = vmatpush1.msra.mxu0 0.0
        %750 = vmatprep.subr.mxu0 0.0
        %751 = vmatpush1.msra.mxu0 0.0
        %752 = vmatprep.subr.mxu0 0.0
        %753 = vmatpush1.msra.mxu0 0.0
        %754 = vmatprep.subr.mxu0 0.0
        %755 = vmatpush1.msra.mxu0 0.0
        %756 = vmatprep.subr.mxu0 0.0
        %757 = vmatpush1.msra.mxu0 0.0
        %758 = vmatprep.subr.mxu0 0.0
        %759 = vmatpush1.msra.mxu0 0.0
        %760 = vmatprep.subr.mxu0 0.0
        %761 = vmatpush1.msra.mxu0 0.0
        %762 = vmatprep.subr.mxu0 0.0
        %763 = vmatpush1.msra.mxu0 0.0
        %764 = vmatprep.subr.mxu0 0.0
        %765 = vmatpush1.msra.mxu0 0.0
        %766 = vmatprep.subr.mxu0 0.0
        %767 = vmatpush1.msra.mxu0 0.0
        %768 = vmatprep.subr.mxu0 0.0
        %769 = vmatpush1.msra.mxu0 0.0
        %770 = vmatprep.subr.mxu0 0.0
        %771 = vmatpush1.msra.mxu0 0.0
        %772 = vmatprep.subr.mxu0 0.0
        %773 = vmatpush1.msra.mxu0 0.0
        %774 = vmatprep.subr.mxu0 0.0
        %775 = vmatpush1.msra.mxu0 0.0
        %776 = vmatprep.subr.mxu0 0.0
        %777 = vmatpush1.msra.mxu0 0.0
        %778 = vmatprep.subr.mxu0 0.0
        %779 = vmatpush1.msra.mxu0 0.0
        %780 = vmatprep.subr.mxu0 0.0
        %781 = vmatpush1.msra.mxu0 0.0
        %782 = vmatprep.subr.mxu0 0.0
        %783 = vmatpush1.msra.mxu0 0.0
        %784 = vmatprep.subr.mxu0 0.0
        %785 = vmatpush1.msra.mxu0 0.0
        %786 = vmatprep.subr.mxu0 0.0
        %787 = vmatpush1.msra.mxu0 0.0
        %788 = vmatprep.subr.mxu0 0.0
        %789 = vmatpush1.msra.mxu0 0.0
        %790 = vmatprep.subr.mxu0 0.0
        %791 = vmatpush1.msra.mxu0 0.0
        %792 = vmatprep.subr.mxu0 0.0
        %793 = vmatpush1.msra.mxu0 0.0
        %794 = vmatprep.subr.mxu0 0.0
        %795 = vmatpush1.msra.mxu0 0.0
        %796 = vmatprep.subr.mxu0 0.0
        %797 = vmatpush1.msra.mxu0 0.0
        %798 = vmatprep.mubr.f32.mxu0 0.0
        %799 = vmatmul.mubr.f32.gmra.mrb[0].mxu0 %v732
        %v800 = vpop.f32.mrb[0].mxu0
        %v801 = vadd.f32 0.0, %v800
        %v802 = vpop.f32.mrb[0].mxu0
        %803 = vdwg.mxu0
        %804 = vrot.lane.b32.xlu0 %v296, 104
        %v805 = vpop.permute.xlu0 %804
        %806 = vrot.lane.b32.xlu0 %v297, 104
        %v807 = vpop.permute.xlu0 %806
        %v808 = vsel %vm304, %v805, 0
        %v810 = vsel %vm304, %v807, 0
        %812 = vmatprep.subr.mxu0 0.0
        %813 = vmatpush1.xpose.msra.mxu0 %v810
        %814 = vmatprep.subr.mxu0 0.0
        %815 = vmatpush1.xpose.msra.mxu0 0.0
        %816 = vmatprep.subr.mxu0 0.0
        %817 = vmatpush1.xpose.msra.mxu0 0.0
        %818 = vmatprep.subr.mxu0 0.0
        %819 = vmatpush1.xpose.msra.mxu0 0.0
        %820 = vmatprep.subr.mxu0 0.0
        %821 = vmatpush1.xpose.msra.mxu0 0.0
        %822 = vmatprep.subr.mxu0 0.0
        %823 = vmatpush1.xpose.msra.mxu0 0.0
        %824 = vmatprep.subr.mxu0 0.0
        %825 = vmatpush1.xpose.msra.mxu0 0.0
        %826 = vmatprep.subr.mxu0 0.0
        %827 = vmatpush1.xpose.msra.mxu0 0.0
        %828 = vmatprep.subr.mxu0 0.0
        %829 = vmatpush1.xpose.msra.mxu0 0.0
        %830 = vmatprep.subr.mxu0 0.0
        %831 = vmatpush1.xpose.msra.mxu0 0.0
        %832 = vmatprep.subr.mxu0 0.0
        %833 = vmatpush1.xpose.msra.mxu0 0.0
        %834 = vmatprep.subr.mxu0 0.0
        %835 = vmatpush1.xpose.msra.mxu0 0.0
        %836 = vmatprep.subr.mxu0 0.0
        %837 = vmatpush1.xpose.msra.mxu0 0.0
        %838 = vmatprep.subr.mxu0 0.0
        %839 = vmatpush1.xpose.msra.mxu0 0.0
        %840 = vmatprep.subr.mxu0 0.0
        %841 = vmatpush1.xpose.msra.mxu0 0.0
        %842 = vmatprep.subr.mxu0 0.0
        %843 = vmatpush1.xpose.msra.mxu0 0.0
        %844 = vmatprep.subr.mxu0 0.0
        %845 = vmatpush1.xpose.msra.mxu0 0.0
        %846 = vmatprep.subr.mxu0 0.0
        %847 = vmatpush1.xpose.msra.mxu0 0.0
        %848 = vmatprep.subr.mxu0 0.0
        %849 = vmatpush1.xpose.msra.mxu0 0.0
        %850 = vmatprep.subr.mxu0 0.0
        %851 = vmatpush1.xpose.msra.mxu0 0.0
        %852 = vmatprep.subr.mxu0 0.0
        %853 = vmatpush1.xpose.msra.mxu0 0.0
        %854 = vmatprep.subr.mxu0 0.0
        %855 = vmatpush1.xpose.msra.mxu0 0.0
        %856 = vmatprep.subr.mxu0 0.0
        %857 = vmatpush1.xpose.msra.mxu0 0.0
        %858 = vmatprep.subr.mxu0 0.0
        %859 = vmatpush1.xpose.msra.mxu0 0.0
        %860 = vmatprep.subr.mxu0 0.0
        %861 = vmatpush1.xpose.msra.mxu0 0.0
        %862 = vmatprep.subr.mxu0 0.0
        %863 = vmatpush1.xpose.msra.mxu0 0.0
        %864 = vmatprep.subr.mxu0 0.0
        %865 = vmatpush1.xpose.msra.mxu0 0.0
        %866 = vmatprep.subr.mxu0 0.0
        %867 = vmatpush1.xpose.msra.mxu0 0.0
        %868 = vmatprep.subr.mxu0 0.0
        %869 = vmatpush1.xpose.msra.mxu0 0.0
        %870 = vmatprep.subr.mxu0 0.0
        %871 = vmatpush1.xpose.msra.mxu0 0.0
        %872 = vmatprep.subr.mxu0 0.0
        %873 = vmatpush1.xpose.msra.mxu0 0.0
        %874 = vmatprep.subr.mxu0 0.0
        %875 = vmatpush1.xpose.msra.mxu0 0.0
        %876 = vmatprep.mubr.f32.mxu0 0.0
        %877 = vmatmul.mubr.f32.gmra.mrb[0].mxu0 %v808
        %v878 = vpop.f32.mrb[0].mxu0
        %v879 = vadd.f32 0.0, %v878
        %v880 = vpop.f32.mrb[0].mxu0
        %881 = vdwg.mxu0
        %v882 = vsel %vm303, %v879, -1e+20
        %v883 = vsel %vm304, %v882, -inf
        %884 = vmax.xlane.f32.xlu0 %v883
        %v885 = vpop.xlane.xlu0 %884
        %v886 = vsub.f32 %v882, %v885
        %v887 = vmul.f32 %v886, 1.442695
        %v888 = vpow.pop %v887
        %v889 = vsel %vm304, %v888, 0.0
        %890 = vadd.xlane.f32.xlu0 %v889
        %v891 = vpop.xlane.xlu0 %890
        %v892 = vrcp.pop %v891
        %v893 = vmul.f32 %v888, %v892
        %s894 = scalar_lea.vmem %s294, 24 [#allocation9]
        %895 = vst.msk [vmem:[%s894] sm:$0xff] %vm304, %v893
        %896 = vrot.lane.b32.xlu0 %v298, 104
        %v897 = vpop.permute.xlu0 %896
        %v900 = vsel %vm304, %v893, 0
        %902 = vmatprep.subr.mxu0 0.0
        %903 = vmatpush1.msra.mxu0 %v897
        %904 = vmatprep.subr.mxu0 0.0
        %905 = vmatpush1.msra.mxu0 0.0
        %906 = vmatprep.subr.mxu0 0.0
        %907 = vmatpush1.msra.mxu0 0.0
        %908 = vmatprep.subr.mxu0 0.0
        %909 = vmatpush1.msra.mxu0 0.0
        %910 = vmatprep.subr.mxu0 0.0
        %911 = vmatpush1.msra.mxu0 0.0
        %912 = vmatprep.subr.mxu0 0.0
        %913 = vmatpush1.msra.mxu0 0.0
        %914 = vmatprep.subr.mxu0 0.0
        %915 = vmatpush1.msra.mxu0 0.0
        %916 = vmatprep.subr.mxu0 0.0
        %917 = vmatpush1.msra.mxu0 0.0
        %918 = vmatprep.subr.mxu0 0.0
        %919 = vmatpush1.msra.mxu0 0.0
        %920 = vmatprep.subr.mxu0 0.0
        %921 = vmatpush1.msra.mxu0 0.0
        %922 = vmatprep.subr.mxu0 0.0
        %923 = vmatpush1.msra.mxu0 0.0
        %924 = vmatprep.subr.mxu0 0.0
        %925 = vmatpush1.msra.mxu0 0.0
        %926 = vmatprep.subr.mxu0 0.0
        %927 = vmatpush1.msra.mxu0 0.0
        %928 = vmatprep.subr.mxu0 0.0
        %929 = vmatpush1.msra.mxu0 0.0
        %930 = vmatprep.subr.mxu0 0.0
        %931 = vmatpush1.msra.mxu0 0.0
        %932 = vmatprep.subr.mxu0 0.0
        %933 = vmatpush1.msra.mxu0 0.0
        %934 = vmatprep.subr.mxu0 0.0
        %935 = vmatpush1.msra.mxu0 0.0
        %936 = vmatprep.subr.mxu0 0.0
        %937 = vmatpush1.msra.mxu0 0.0
        %938 = vmatprep.subr.mxu0 0.0
        %939 = vmatpush1.msra.mxu0 0.0
        %940 = vmatprep.subr.mxu0 0.0
        %941 = vmatpush1.msra.mxu0 0.0
        %942 = vmatprep.subr.mxu0 0.0
        %943 = vmatpush1.msra.mxu0 0.0
        %944 = vmatprep.subr.mxu0 0.0
        %945 = vmatpush1.msra.mxu0 0.0
        %946 = vmatprep.subr.mxu0 0.0
        %947 = vmatpush1.msra.mxu0 0.0
        %948 = vmatprep.subr.mxu0 0.0
        %949 = vmatpush1.msra.mxu0 0.0
        %950 = vmatprep.subr.mxu0 0.0
        %951 = vmatpush1.msra.mxu0 0.0
        %952 = vmatprep.subr.mxu0 0.0
        %953 = vmatpush1.msra.mxu0 0.0
        %954 = vmatprep.subr.mxu0 0.0
        %955 = vmatpush1.msra.mxu0 0.0
        %956 = vmatprep.subr.mxu0 0.0
        %957 = vmatpush1.msra.mxu0 0.0
        %958 = vmatprep.subr.mxu0 0.0
        %959 = vmatpush1.msra.mxu0 0.0
        %960 = vmatprep.subr.mxu0 0.0
        %961 = vmatpush1.msra.mxu0 0.0
        %962 = vmatprep.subr.mxu0 0.0
        %963 = vmatpush1.msra.mxu0 0.0
        %964 = vmatprep.subr.mxu0 0.0
        %965 = vmatpush1.msra.mxu0 0.0
        %966 = vmatprep.mubr.f32.mxu0 0.0
        %967 = vmatmul.mubr.f32.gmra.mrb[0].mxu0 %v900
        %v968 = vpop.f32.mrb[0].mxu0
        %v969 = vadd.f32 0.0, %v968
        %v970 = vpop.f32.mrb[0].mxu0
        %971 = vdwg.mxu0
        %973 = vrot.lane.b32.xlu0 %v633, 8
        %v974 = vpop.permute.xlu0 %973
        %977 = vrot.lane.b32.xlu0 %v801, 16
        %v978 = vpop.permute.xlu0 %977
        %981 = vrot.lane.b32.xlu0 %v969, 24
        %v982 = vpop.permute.xlu0 %981
        %v984 = vsel %vm304, %v464, %v974
        %vm985 = vcmask 130048
        %v986 = vsel %vm985, %v984, %v978
        %vm987 = vcmask 195584
        %v988 = vsel %vm987, %v986, %v982
        %vm989 = vcmask 261120
        %990 = vst.msk [vmem:[%s287] sm:$0xff] %vm989, %v988
        %s991 = sand.u32 %s114, 1
        %s992 = scalar_lea.sflag [#allocation4], %s991
        %s993 = sand.u32 %s114, 1
        %s994 = smul.addr %s993, 8
        %s995 = scalar_lea.vmem [#allocation8], %s994
        %s996 = sand.u32 %s140, 1
        %s997 = scalar_lea.sflag [#allocation10], %s996
        %s998 = sand.u32 %s140, 1
        %s999 = smul.addr %s998, 32
        %s1000 = scalar_lea.vmem [#allocation9], %s999
        // Predicated region
        $region45: #{tpu_custom_call.1} parent=31 // pred_check
          %p1001 = pneg %p124
        $region46: #{tpu_custom_call.1} parent=31 // pred_check_branch
          %1003 = sbr.rel (%p1001) target = $region48
        $region47: #{tpu_custom_call.1} parent=31 // pred_region
          %s1005 = ssub.s32 128, 128
          %1006 = vsyncadd %s992, %s1005
          %s1007 = smul.addr %s28, 128
          %s1008 = scalar_lea.hbm %s3, %s1007
          %s1010 = sshll.u32 %s995, 4
          %s1011 = int_to_ptr.vmem [resolvable:$true] %s1010
          %1013 = dma.vmem_to_hbm [thread:$0]  %s1011, 128, %s1008, %s992
        $region48: #{tpu_custom_call.1} parent=31 // pred_fallthru
          _
        // Predicated region
        $region49: #{tpu_custom_call.1} parent=31 // pred_check
          %p1014 = pneg %p150
        $region50: #{tpu_custom_call.1} parent=31 // pred_check_branch
          %1016 = sbr.rel (%p1014) target = $region52
        $region51: #{tpu_custom_call.1} parent=31 // pred_region
          %s1018 = ssub.s32 512, 512
          %1019 = vsyncadd %s997, %s1018
          %s1020 = smul.addr %s28, 4
          %s1021 = smul.addr %s1020, 128
          %s1022 = scalar_lea.hbm %s4, %s1021
          %s1023 = sshll.u32 %s1000, 4
          %s1024 = int_to_ptr.vmem [resolvable:$true] %s1023
          %1029 = dma.vmem_to_hbm [thread:$0]  %s1024, 512, %s1022, %s997, 128, 128, 8
        $region52: #{tpu_custom_call.1} parent=31 // pred_fallthru
          _
      $region32: #{tpu_custom_call.1} parent=5 // pred_fallthru
        _
      %p1030 = scmp.le.s32.totalorder 2, %s23
      // Predicated region
      $region53: #{tpu_custom_call.1} parent=5 // pred_check
        %p1031 = pneg %p1030
      $region54: #{tpu_custom_call.1} parent=5 // pred_check_branch
        %1033 = sbr.rel (%p1031) target = $region56
      $region55: #{tpu_custom_call.1} parent=5 // pred_region
        %s1034 = ssub.s32 %s23, 2
        // Predicated region
        $region57: #{tpu_custom_call.1} parent=55 // pred_check
          %p1035 = pneg %p130
        $region58: #{tpu_custom_call.1} parent=55 // pred_check_branch
          %1037 = sbr.rel (%p1035) target = $region60
        $region59: #{tpu_custom_call.1} parent=55 // pred_region
          %s1038 = sand.u32 %s115, 1
          %s1039 = scalar_lea.sflag [#allocation4], %s1038
          %s1040 = sand.u32 %s115, 1
          %s1041 = smul.addr %s1040, 8
          %s1042 = scalar_lea.vmem [#allocation8], %s1041
          %1043 = dma.done %s1039, 128
        $region60: #{tpu_custom_call.1} parent=55 // pred_fallthru
          _
        // Predicated region
        $region61: #{tpu_custom_call.1} parent=55 // pred_check
          %p1044 = pneg %p156
        $region62: #{tpu_custom_call.1} parent=55 // pred_check_branch
          %1046 = sbr.rel (%p1044) target = $region64
        $region63: #{tpu_custom_call.1} parent=55 // pred_region
          %s1047 = sand.u32 %s141, 1
          %s1048 = scalar_lea.sflag [#allocation10], %s1047
          %s1049 = sand.u32 %s141, 1
          %s1050 = smul.addr %s1049, 32
          %s1051 = scalar_lea.vmem [#allocation9], %s1050
          %1052 = dma.done %s1048, 512
        $region64: #{tpu_custom_call.1} parent=55 // pred_fallthru
          _
      $region56: #{tpu_custom_call.1} parent=5 // pred_fallthru
        _
    $region6: #{tpu_custom_call.1} parent=1 // loop_footer
      %s27 = sadd.s32 1, %s23
    $region7: #{tpu_custom_call.1} parent=1 // loop_footer_branch
      %22 = sbr.rel target = $region3
    $region8: #{tpu_custom_call.1} parent=1 // loop_exit
      _
    %1053 = vsyncpa [#allocation3], 1
    %s1054 = scalar_lea.sflag [#allocation3], 1
    %1055 = vsyncpa %s1054, 1
    %1056 = vsyncpa [#allocation6], 1
    %s1057 = scalar_lea.sflag [#allocation6], 1
    %1058 = vsyncpa %s1057, 1
    %1059 = vsyncpa [#allocation4], 1
    %s1060 = scalar_lea.sflag [#allocation4], 1
    %1061 = vsyncpa %s1060, 1
    %1062 = vsyncpa [#allocation10], 1
    %s1063 = scalar_lea.sflag [#allocation10], 1
    %1064 = vsyncpa %s1063, 1

</llo_original>
